<compile_context>
chip_gen: v6e
topology: v6e:2x2x1
jax: 0.10.0
libtpu: 0.0.40
codegen_flags: <defaults>
</compile_context>

<pallas_src>
import jax
import jax.numpy as jnp
from jax.experimental import pallas as pl
from jax.experimental.pallas import tpu as pltpu

HIDDEN = 768
NUM_CLASSES = 3
OUT_LANES = 128                        # lane-dense padded class axis
_VMEM_LIMIT_BYTES = 32 * 1024 * 1024   # v7x has 64 MiB/TC; leave ample headroom


def _round_up(x, m):
    return (x + m - 1) // m * m


def _pick_batch_tile(batch):
    """Batch tile: multiple of 8, <=128, and >=2 grid steps when possible."""
    b8 = _round_up(batch, 8)
    tb = min(128, b8)
    if b8 // tb < 2 and b8 >= 16:      # v7x: keep both TensorCores busy
        tb = _round_up(b8 // 2, 8)
    return tb


def bert_head_kernel(ids_ref, mask_ref, tbl_ref, wp_ref, bp_ref, wf_ref,
                     bf_ref, out_ref, ebuf_ref, pooled_ref, sem_ref):
    # ids_ref   : SMEM [B_pad*S] int32 (scalar prefetch)
    # mask_ref  : VMEM [TB, S] f32        tbl_ref: HBM [V, H] f32 (pl.ANY)
    # wp_ref    : VMEM [H, H] bf16        bp_ref : VMEM [1, H] f32
    # wf_ref    : VMEM [H, 128] bf16      bf_ref : VMEM [1, 128] f32
    # out_ref   : VMEM [TB, 128] f32
    # ebuf_ref  : VMEM [2, S, H] f32 (double-buffered gather staging)
    # pooled_ref: VMEM [TB, H] f32 (masked-sum rows)
    # sem_ref   : DMA semaphores (2,), one per staging slot
    TB, S = mask_ref.shape
    H = ebuf_ref.shape[-1]
    V = tbl_ref.shape[0]
    base = pl.program_id(0) * TB * S

    def row_copy(slot, s, row):
        return pltpu.make_async_copy(tbl_ref.at[pl.ds(row, 1), :],
                                     ebuf_ref.at[slot, pl.ds(s, 1), :],
                                     sem_ref.at[slot])

    def start_chunk(b, slot):
        # Issue the S row DMAs of batch row `b` into staging slot `slot`.
        @pl.loop(0, S)
        def _(s):
            row = ids_ref[base + b * S + s]
            row = jnp.minimum(jnp.maximum(row, 0), V - 1)  # bounds-safe gather
            row_copy(slot, s, row).start()

    def wait_chunk(slot):
        # Every copy of a chunk is identical in size (one f32 table row), so a
        # reconstructed same-size descriptor per row waits exactly.
        @pl.loop(0, S)
        def _(s):
            row_copy(slot, s, 0).wait()

    # Prime the pipeline with batch row 0, then stream: prefetch row b+1 into
    # the other slot while reducing row b.
    start_chunk(0, 0)

    @pl.loop(0, TB)
    def _(b):
        slot = b & 1

        @pl.when(b + 1 < TB)
        def _():
            start_chunk(b + 1, 1 - slot)

        wait_chunk(slot)
        # Masked sum over the sequence as one MXU vector-matrix product:
        #   pooled[b, :] = mask[b, :] @ emb_chunk   ([1,S] x [S,H], f32 acc)
        mask_row = mask_ref[pl.ds(b, 1), :]               # [1, S] f32
        pooled_ref[pl.ds(b, 1), :] = jnp.dot(
            mask_row, ebuf_ref[slot], preferred_element_type=jnp.float32)

    # Mean pool (exact divide), then pooler dense+tanh and fc1 on the MXU.
    denom = jnp.maximum(jnp.sum(mask_ref[...], axis=1, keepdims=True), 1.0)
    pooled = pooled_ref[...] / denom                      # [TB, H] f32

    # BERT pooler: dense(768->768) + tanh  (bf16 MXU, f32 accumulate).
    cls_hs = jnp.tanh(
        jnp.dot(pooled.astype(wp_ref.dtype), wp_ref[...],
                preferred_element_type=jnp.float32) + bp_ref[...])

    # fc1: dense(768 -> 3), zero-padded to 128 lanes.
    logits = jnp.dot(cls_hs.astype(wf_ref.dtype), wf_ref[...],
                     preferred_element_type=jnp.float32) + bf_ref[...]

    # LogSoftmax over the valid class lanes only; padded lanes masked out.
    lane = jax.lax.broadcasted_iota(jnp.int32, logits.shape, 1)
    logits = jnp.where(lane < NUM_CLASSES, logits, jnp.float32(-1e30))
    m = jnp.max(logits, axis=1, keepdims=True)
    z = logits - m
    out_ref[...] = z - jnp.log(jnp.sum(jnp.exp(z), axis=1, keepdims=True))


def pack_params(params):
    """One-time weight packing: bf16 matmul weights, lane-dense padded fc."""
    emb_table, w_pool, b_pool, w_fc, b_fc = params
    w_fc_pad = jnp.zeros((HIDDEN, OUT_LANES), jnp.float32)
    w_fc_pad = w_fc_pad.at[:, :NUM_CLASSES].set(w_fc)
    b_fc_pad = jnp.zeros((1, OUT_LANES), jnp.float32)
    b_fc_pad = b_fc_pad.at[:, :NUM_CLASSES].set(b_fc.reshape(1, NUM_CLASSES))
    return (emb_table.astype(jnp.float32),
            w_pool.astype(jnp.bfloat16),
            b_pool.astype(jnp.float32).reshape(1, HIDDEN),
            w_fc_pad.astype(jnp.bfloat16),
            b_fc_pad)


def bert_arch_forward(sent_id, mask, packed):
    """sent_id: [B, S] int32, mask: [B, S] (0/1). Returns [B, 3] log-probs."""
    emb_table, w_pool, b_pool, w_fc, b_fc = packed
    B, S = sent_id.shape
    _, H = emb_table.shape

    TB = _pick_batch_tile(B)
    B_pad = _round_up(B, TB)

    ids = jnp.zeros((B_pad, S), jnp.int32).at[:B].set(sent_id.astype(jnp.int32))
    mask_f = jnp.zeros((B_pad, S), jnp.float32).at[:B].set(
        mask.astype(jnp.float32))

    grid_spec = pltpu.PrefetchScalarGridSpec(
        num_scalar_prefetch=1,
        grid=(B_pad // TB,),
        in_specs=[
            pl.BlockSpec((TB, S), lambda i, _ids: (i, 0)),          # mask tile
            pl.BlockSpec(memory_space=pl.ANY),                      # emb table (HBM)
            pl.BlockSpec((H, H), lambda i, _ids: (0, 0)),           # pooler W
            pl.BlockSpec((1, H), lambda i, _ids: (0, 0)),           # pooler b
            pl.BlockSpec((H, OUT_LANES), lambda i, _ids: (0, 0)),   # fc W (padded)
            pl.BlockSpec((1, OUT_LANES), lambda i, _ids: (0, 0)),   # fc b (padded)
        ],
        out_specs=pl.BlockSpec((TB, OUT_LANES), lambda i, _ids: (i, 0)),
        scratch_shapes=[
            pltpu.VMEM((2, S, H), jnp.float32),     # gather staging (2-deep)
            pltpu.VMEM((TB, H), jnp.float32),       # pooled rows
            pltpu.SemaphoreType.DMA((2,)),          # one sem per staging slot
        ],
    )

    out = pl.pallas_call(
        bert_head_kernel,
        out_shape=jax.ShapeDtypeStruct((B_pad, OUT_LANES), jnp.float32),
        grid_spec=grid_spec,
        compiler_params=pltpu.CompilerParams(
            dimension_semantics=("parallel",),       # batch tiles over 2 TCs (v7x)
            vmem_limit_bytes=_VMEM_LIMIT_BYTES,
        ),
    )(ids.reshape(-1), mask_f, emb_table, w_pool, b_pool, w_fc, b_fc)

    return out[:B, :NUM_CLASSES]


def reference_forward(sent_id, mask, params):
    """Pure-JAX f32 reference with identical semantics."""
    emb_table, w_pool, b_pool, w_fc, b_fc = params
    emb = emb_table[sent_id]
    m = mask.astype(jnp.float32)
    pooled = jnp.sum(emb * m[:, :, None], axis=1) / jnp.maximum(
        jnp.sum(m, axis=1, keepdims=True), 1.0)
    cls_hs = jnp.tanh(pooled @ w_pool + b_pool)
    logits = cls_hs @ w_fc + b_fc
    return jax.nn.log_softmax(logits, axis=1)


def init_params(key, vocab_size=128):
    k0, k1, k2, k3, k4 = jax.random.split(key, 5)
    emb_table = jax.random.normal(k0, (vocab_size, HIDDEN), jnp.float32) * 0.02
    w_pool = jax.random.normal(k1, (HIDDEN, HIDDEN), jnp.float32) * 0.02
    b_pool = jax.random.normal(k2, (1, HIDDEN), jnp.float32) * 0.02
    w_fc = jax.random.normal(k3, (HIDDEN, NUM_CLASSES), jnp.float32) * 0.02
    b_fc = jax.random.normal(k4, (1, NUM_CLASSES), jnp.float32) * 0.02
    return emb_table, w_pool, b_pool, w_fc, b_fc


if __name__ == "__main__":
    key = jax.random.PRNGKey(0)
    pk, ik = jax.random.split(key, 2)

    B, S, VOCAB = 2, 8, 128
    params = init_params(pk, vocab_size=VOCAB)
    sent_id = jax.random.randint(ik, (B, S), 0, VOCAB, dtype=jnp.int32)
    # First 6 tokens valid, last 2 padding
    mask = (jnp.arange(S)[None, :] < 6).astype(jnp.int32).repeat(B, axis=0)

    packed = pack_params(params)
    out = bert_arch_forward(sent_id, mask, packed)
    out = jax.block_until_ready(out)

    assert out.shape == (B, NUM_CLASSES)
    # log-softmax rows must sum to ~1 in prob space
    assert jnp.allclose(jnp.sum(jnp.exp(out), axis=1), 1.0, atol=1e-5)
    # numerical check against a pure-JAX f32 reference (bf16 weight slack)
    ref = reference_forward(sent_id, mask, params)
    assert jnp.allclose(out, ref, atol=1e-2), (out, ref)
    print("KERNEL_OK")
</pallas_src>

<mosaic_0001>
module attributes {stable_mosaic.version = 11 : i64} {
  func.func @bert_head_kernel(%arg0: i32, %arg1: memref<64xi32, #tpu.memory_space<smem>>, %arg2: memref<8x8xf32, #tpu.memory_space<vmem>>, %arg3: memref<128x768xf32, #tpu.memory_space<any>>, %arg4: memref<768x768xbf16, #tpu.memory_space<vmem>>, %arg5: memref<1x768xf32, #tpu.memory_space<vmem>>, %arg6: memref<768x128xbf16, #tpu.memory_space<vmem>>, %arg7: memref<1x128xf32, #tpu.memory_space<vmem>>, %arg8: memref<8x128xf32, #tpu.memory_space<vmem>>, %arg9: memref<2x8x768xf32, #tpu.memory_space<vmem>>, %arg10: memref<8x768xf32, #tpu.memory_space<vmem>>, %arg11: memref<2x!tpu.dma_semaphore, #tpu.memory_space<semaphore_mem>>) attributes {dimension_semantics = [#tpu.dimension_semantics<parallel>], iteration_bounds = array<i64: 1>, scalar_prefetch = 1 : i64, scratch_operands = 3 : i64, tpu.core_type = #tpu.core_type<tc>, window_params = [{transform_indices = @transform_0, window_bounds = array<i64: 8, 8>}, {}, {pipeline_mode = #tpu.pipeline_mode<synchronous>, transform_indices = @transform_2, window_bounds = array<i64: 768, 768>}, {pipeline_mode = #tpu.pipeline_mode<synchronous>, transform_indices = @transform_3, window_bounds = array<i64: 1, 768>}, {pipeline_mode = #tpu.pipeline_mode<synchronous>, transform_indices = @transform_4, window_bounds = array<i64: 768, 128>}, {pipeline_mode = #tpu.pipeline_mode<synchronous>, transform_indices = @transform_5, window_bounds = array<i64: 1, 128>}, {transform_indices = @transform_6, window_bounds = array<i64: 8, 128>}]} {
    %c8_i32 = arith.constant 8 : i32
    %0 = arith.muli %arg0, %c8_i32 : i32
    %c8_i32_0 = arith.constant 8 : i32
    %1 = arith.muli %0, %c8_i32_0 : i32
    %c0_i32 = arith.constant 0 : i32
    %c8_i32_1 = arith.constant 8 : i32
    %2 = arith.addi %c0_i32, %c8_i32_1 : i32
    %c1_i32 = arith.constant 1 : i32
    scf.for %arg12 = %c0_i32 to %2 step %c1_i32  : i32 {
      %c1_i32_26 = arith.constant 1 : i32
      %41 = arith.muli %arg12, %c1_i32_26 : i32
      %c0_i32_27 = arith.constant 0 : i32
      %42 = arith.addi %c0_i32_27, %41 : i32
      %c0_i32_28 = arith.constant 0 : i32
      %43 = arith.addi %1, %c0_i32_28 : i32
      %44 = arith.addi %43, %42 : i32
      %45 = arith.index_cast %44 : i32 to index
      %46 = memref.load %arg1[%45] : memref<64xi32, #tpu.memory_space<smem>>
      %c0_i32_29 = arith.constant 0 : i32
      %47 = arith.maxsi %46, %c0_i32_29 : i32
      %c127_i32 = arith.constant 127 : i32
      %48 = arith.minsi %47, %c127_i32 : i32
      %c0_i32_30 = arith.constant 0 : i32
      %c0_i32_31 = arith.constant 0 : i32
      %c0_i32_32 = arith.constant 0 : i32
      %49 = tpu.memref_slice %arg3[%48, %c0_i32_32] : memref<128x768xf32, #tpu.memory_space<any>> -> memref<1x768xf32, #tpu.memory_space<any>>
      %c0_i32_33 = arith.constant 0 : i32
      %50 = tpu.memref_slice %arg9[%c0_i32_30, %42, %c0_i32_33] : memref<2x8x768xf32, #tpu.memory_space<vmem>> -> memref<1x1x768xf32, #tpu.memory_space<vmem>>
      %51 = tpu.memref_squeeze %50 : memref<1x1x768xf32, #tpu.memory_space<vmem>> -> memref<1x768xf32, #tpu.memory_space<vmem>>
      %52 = tpu.memref_slice %arg11[%c0_i32_31] : memref<2x!tpu.dma_semaphore, #tpu.memory_space<semaphore_mem>> -> memref<1x!tpu.dma_semaphore, #tpu.memory_space<semaphore_mem>>
      %53 = tpu.memref_squeeze %52 : memref<1x!tpu.dma_semaphore, #tpu.memory_space<semaphore_mem>> -> memref<!tpu.dma_semaphore, #tpu.memory_space<semaphore_mem>>
      tpu.enqueue_dma source(%49 : memref<1x768xf32, #tpu.memory_space<any>>) target(%51 : memref<1x768xf32, #tpu.memory_space<vmem>>) target_semaphore(%53 : memref<!tpu.dma_semaphore, #tpu.memory_space<semaphore_mem>>)
    }
    %c8_i32_2 = arith.constant 8 : i32
    %c0_i32_3 = arith.constant 0 : i32
    %c8_i32_4 = arith.constant 8 : i32
    %3 = arith.addi %c0_i32_3, %c8_i32_4 : i32
    %c1_i32_5 = arith.constant 1 : i32
    scf.for %arg12 = %c0_i32_3 to %3 step %c1_i32_5  : i32 {
      %c1_i32_26 = arith.constant 1 : i32
      %41 = arith.muli %arg12, %c1_i32_26 : i32
      %c0_i32_27 = arith.constant 0 : i32
      %42 = arith.addi %c0_i32_27, %41 : i32
      %c1_i32_28 = arith.constant 1 : i32
      %43 = arith.andi %42, %c1_i32_28 : i32
      %c1_i32_29 = arith.constant 1 : i32
      %44 = arith.addi %42, %c1_i32_29 : i32
      %c8_i32_30 = arith.constant 8 : i32
      %45 = arith.cmpi slt, %44, %c8_i32_30 : i32
      %46 = arith.extui %45 : i1 to i32
      %c0_i32_31 = arith.constant 0 : i32
      %47 = arith.cmpi ne, %46, %c0_i32_31 : i32
      scf.if %47 {
        %c1_i32_41 = arith.constant 1 : i32
        %57 = arith.addi %42, %c1_i32_41 : i32
        %c1_i32_42 = arith.constant 1 : i32
        %58 = arith.subi %c1_i32_42, %43 : i32
        %c0_i32_43 = arith.constant 0 : i32
        %c8_i32_44 = arith.constant 8 : i32
        %59 = arith.addi %c0_i32_43, %c8_i32_44 : i32
        %c1_i32_45 = arith.constant 1 : i32
        scf.for %arg13 = %c0_i32_43 to %59 step %c1_i32_45  : i32 {
          %c1_i32_47 = arith.constant 1 : i32
          %60 = arith.muli %arg13, %c1_i32_47 : i32
          %c0_i32_48 = arith.constant 0 : i32
          %61 = arith.addi %c0_i32_48, %60 : i32
          %c8_i32_49 = arith.constant 8 : i32
          %62 = arith.muli %57, %c8_i32_49 : i32
          %63 = arith.addi %1, %62 : i32
          %64 = arith.addi %63, %61 : i32
          %65 = arith.index_cast %64 : i32 to index
          %66 = memref.load %arg1[%65] : memref<64xi32, #tpu.memory_space<smem>>
          %c0_i32_50 = arith.constant 0 : i32
          %67 = arith.maxsi %66, %c0_i32_50 : i32
          %c127_i32 = arith.constant 127 : i32
          %68 = arith.minsi %67, %c127_i32 : i32
          %c0_i32_51 = arith.constant 0 : i32
          %69 = tpu.memref_slice %arg3[%68, %c0_i32_51] : memref<128x768xf32, #tpu.memory_space<any>> -> memref<1x768xf32, #tpu.memory_space<any>>
          %c0_i32_52 = arith.constant 0 : i32
          %70 = tpu.memref_slice %arg9[%58, %61, %c0_i32_52] : memref<2x8x768xf32, #tpu.memory_space<vmem>> -> memref<1x1x768xf32, #tpu.memory_space<vmem>>
          %71 = tpu.memref_squeeze %70 : memref<1x1x768xf32, #tpu.memory_space<vmem>> -> memref<1x768xf32, #tpu.memory_space<vmem>>
          %72 = tpu.memref_slice %arg11[%58] : memref<2x!tpu.dma_semaphore, #tpu.memory_space<semaphore_mem>> -> memref<1x!tpu.dma_semaphore, #tpu.memory_space<semaphore_mem>>
          %73 = tpu.memref_squeeze %72 : memref<1x!tpu.dma_semaphore, #tpu.memory_space<semaphore_mem>> -> memref<!tpu.dma_semaphore, #tpu.memory_space<semaphore_mem>>
          tpu.enqueue_dma source(%69 : memref<1x768xf32, #tpu.memory_space<any>>) target(%71 : memref<1x768xf32, #tpu.memory_space<vmem>>) target_semaphore(%73 : memref<!tpu.dma_semaphore, #tpu.memory_space<semaphore_mem>>)
        }
        %c8_i32_46 = arith.constant 8 : i32
      } else {
      }
      %c0_i32_32 = arith.constant 0 : i32
      %c8_i32_33 = arith.constant 8 : i32
      %48 = arith.addi %c0_i32_32, %c8_i32_33 : i32
      %c1_i32_34 = arith.constant 1 : i32
      scf.for %arg13 = %c0_i32_32 to %48 step %c1_i32_34  : i32 {
        %c1_i32_41 = arith.constant 1 : i32
        %57 = arith.muli %arg13, %c1_i32_41 : i32
        %c0_i32_42 = arith.constant 0 : i32
        %58 = arith.addi %c0_i32_42, %57 : i32
        %c0_i32_43 = arith.constant 0 : i32
        %c0_i32_44 = arith.constant 0 : i32
        %59 = tpu.memref_slice %arg3[%c0_i32_43, %c0_i32_44] : memref<128x768xf32, #tpu.memory_space<any>> -> memref<1x768xf32, #tpu.memory_space<any>>
        %c0_i32_45 = arith.constant 0 : i32
        %60 = tpu.memref_slice %arg9[%43, %58, %c0_i32_45] : memref<2x8x768xf32, #tpu.memory_space<vmem>> -> memref<1x1x768xf32, #tpu.memory_space<vmem>>
        %61 = tpu.memref_squeeze %60 : memref<1x1x768xf32, #tpu.memory_space<vmem>> -> memref<1x768xf32, #tpu.memory_space<vmem>>
        %62 = tpu.memref_slice %arg11[%43] : memref<2x!tpu.dma_semaphore, #tpu.memory_space<semaphore_mem>> -> memref<1x!tpu.dma_semaphore, #tpu.memory_space<semaphore_mem>>
        %63 = tpu.memref_squeeze %62 : memref<1x!tpu.dma_semaphore, #tpu.memory_space<semaphore_mem>> -> memref<!tpu.dma_semaphore, #tpu.memory_space<semaphore_mem>>
        tpu.wait_dma2 semaphore(%63 : memref<!tpu.dma_semaphore, #tpu.memory_space<semaphore_mem>>) src(%59 : memref<1x768xf32, #tpu.memory_space<any>>) dst(%61 : memref<1x768xf32, #tpu.memory_space<vmem>>)
      }
      %c8_i32_35 = arith.constant 8 : i32
      %49 = arith.index_cast %42 : i32 to index
      %c0_36 = arith.constant 0 : index
      %50 = vector.load %arg2[%49, %c0_36] : memref<8x8xf32, #tpu.memory_space<vmem>>, vector<1x8xf32>
      %51 = arith.index_cast %43 : i32 to index
      %c0_37 = arith.constant 0 : index
      %c0_38 = arith.constant 0 : index
      %52 = vector.load %arg9[%51, %c0_37, %c0_38] : memref<2x8x768xf32, #tpu.memory_space<vmem>>, vector<1x8x768xf32>
      %53 = vector.shape_cast %52 : vector<1x8x768xf32> to vector<8x768xf32>
      %cst_39 = arith.constant dense<0.000000e+00> : vector<1x768xf32>
      %54 = tpu.matmul %50, %53, %cst_39 {dimension_numbers = #tpu.dot_dimension_numbers<[1], [0], [0], [1], [0, 0, 1, 1], [], []>} : vector<1x8xf32>, vector<8x768xf32>, vector<1x768xf32> -> vector<1x768xf32>
      %55 = arith.index_cast %42 : i32 to index
      %c0_40 = arith.constant 0 : index
      %56 = vector.load %arg10[%55, %c0_40] : memref<8x768xf32, #tpu.memory_space<vmem>>, vector<1x768xf32>
      tpu.vector_store %arg10[%55, %c0_40], %54 {strides = array<i32>} : memref<8x768xf32, #tpu.memory_space<vmem>>, vector<1x768xf32>,
    }
    %c8_i32_6 = arith.constant 8 : i32
    %c0 = arith.constant 0 : index
    %c0_7 = arith.constant 0 : index
    %4 = vector.load %arg2[%c0, %c0_7] : memref<8x8xf32, #tpu.memory_space<vmem>>, vector<8x8xf32>
    %cst = arith.constant dense<0.000000e+00> : vector<8xf32>
    %5 = vector.multi_reduction <add>, %4, %cst [1] : vector<8x8xf32> to vector<8xf32>
    %6 = vector.shape_cast %5 : vector<8xf32> to vector<8x1xf32>
    %cst_8 = arith.constant 1.000000e+00 : f32
    %7 = vector.broadcast %cst_8 : f32 to vector<8x1xf32>
    %8 = arith.maximumf %6, %7 : vector<8x1xf32>
    %c0_9 = arith.constant 0 : index
    %c0_10 = arith.constant 0 : index
    %9 = vector.load %arg10[%c0_9, %c0_10] : memref<8x768xf32, #tpu.memory_space<vmem>>, vector<8x768xf32>
    %10 = vector.broadcast %8 : vector<8x1xf32> to vector<8x768xf32>
    %11 = arith.divf %9, %10 : vector<8x768xf32>
    %12 = arith.truncf %11 : vector<8x768xf32> to vector<8x768xbf16>
    %c0_11 = arith.constant 0 : index
    %c0_12 = arith.constant 0 : index
    %13 = vector.load %arg4[%c0_11, %c0_12] : memref<768x768xbf16, #tpu.memory_space<vmem>>, vector<768x768xbf16>
    %cst_13 = arith.constant dense<0.000000e+00> : vector<8x768xf32>
    %14 = tpu.matmul %12, %13, %cst_13 {dimension_numbers = #tpu.dot_dimension_numbers<[1], [0], [0], [1], [0, 0, 1, 1], [], []>} : vector<8x768xbf16>, vector<768x768xbf16>, vector<8x768xf32> -> vector<8x768xf32>
    %c0_14 = arith.constant 0 : index
    %c0_15 = arith.constant 0 : index
    %15 = vector.load %arg5[%c0_14, %c0_15] : memref<1x768xf32, #tpu.memory_space<vmem>>, vector<1x768xf32>
    %16 = vector.broadcast %15 : vector<1x768xf32> to vector<8x768xf32>
    %17 = arith.addf %14, %16 : vector<8x768xf32>
    %18 = math.tanh %17 : vector<8x768xf32>
    %19 = arith.truncf %18 : vector<8x768xf32> to vector<8x768xbf16>
    %c0_16 = arith.constant 0 : index
    %c0_17 = arith.constant 0 : index
    %20 = vector.load %arg6[%c0_16, %c0_17] : memref<768x128xbf16, #tpu.memory_space<vmem>>, vector<768x128xbf16>
    %cst_18 = arith.constant dense<0.000000e+00> : vector<8x128xf32>
    %21 = tpu.matmul %19, %20, %cst_18 {dimension_numbers = #tpu.dot_dimension_numbers<[1], [0], [0], [1], [0, 0, 1, 1], [], []>} : vector<8x768xbf16>, vector<768x128xbf16>, vector<8x128xf32> -> vector<8x128xf32>
    %c0_19 = arith.constant 0 : index
    %c0_20 = arith.constant 0 : index
    %22 = vector.load %arg7[%c0_19, %c0_20] : memref<1x128xf32, #tpu.memory_space<vmem>>, vector<1x128xf32>
    %23 = vector.broadcast %22 : vector<1x128xf32> to vector<8x128xf32>
    %24 = arith.addf %21, %23 : vector<8x128xf32>
    %25 = tpu.iota {dimensions = array<i32: 1>} : vector<8x128xi32>
    %c3_i32 = arith.constant 3 : i32
    %26 = vector.broadcast %c3_i32 : i32 to vector<8x128xi32>
    %27 = arith.cmpi slt, %25, %26 : vector<8x128xi32>
    %cst_21 = arith.constant -1.000000e+30 : f32
    %28 = vector.broadcast %cst_21 : f32 to vector<8x128xf32>
    %29 = arith.select %27, %24, %28 : vector<8x128xi1>, vector<8x128xf32>
    %cst_22 = arith.constant dense<0xFF800000> : vector<8xf32>
    %30 = vector.multi_reduction <maximumf>, %29, %cst_22 [1] : vector<8x128xf32> to vector<8xf32>
    %31 = vector.shape_cast %30 : vector<8xf32> to vector<8x1xf32>
    %32 = vector.broadcast %31 : vector<8x1xf32> to vector<8x128xf32>
    %33 = arith.subf %29, %32 : vector<8x128xf32>
    %34 = math.exp %33 : vector<8x128xf32>
    %cst_23 = arith.constant dense<0.000000e+00> : vector<8xf32>
    %35 = vector.multi_reduction <add>, %34, %cst_23 [1] : vector<8x128xf32> to vector<8xf32>
    %36 = vector.shape_cast %35 : vector<8xf32> to vector<8x1xf32>
    %37 = math.log %36 : vector<8x1xf32>
    %38 = vector.broadcast %37 : vector<8x1xf32> to vector<8x128xf32>
    %39 = arith.subf %33, %38 : vector<8x128xf32>
    %c0_24 = arith.constant 0 : index
    %c0_25 = arith.constant 0 : index
    %40 = vector.load %arg8[%c0_24, %c0_25] : memref<8x128xf32, #tpu.memory_space<vmem>>, vector<8x128xf32>
    tpu.vector_store %arg8[%c0_24, %c0_25], %39 {strides = array<i32>} : memref<8x128xf32, #tpu.memory_space<vmem>>, vector<8x128xf32>,
    return
  }
  func.func @transform_0(%arg0: i32, %arg1: memref<64xi32, #tpu.memory_space<smem>>) -> (i32, i32) {
    %c0_i32 = arith.constant 0 : i32
    %c0_i32_0 = arith.constant 0 : i32
    return %arg0, %c0_i32 : i32, i32
  }
  func.func @transform_2(%arg0: i32, %arg1: memref<64xi32, #tpu.memory_space<smem>>) -> (i32, i32) {
    %c0_i32 = arith.constant 0 : i32
    %c0_i32_0 = arith.constant 0 : i32
    %c0_i32_1 = arith.constant 0 : i32
    return %c0_i32, %c0_i32_0 : i32, i32
  }
  func.func @transform_3(%arg0: i32, %arg1: memref<64xi32, #tpu.memory_space<smem>>) -> (i32, i32) {
    %c0_i32 = arith.constant 0 : i32
    %c0_i32_0 = arith.constant 0 : i32
    %c0_i32_1 = arith.constant 0 : i32
    return %c0_i32, %c0_i32_0 : i32, i32
  }
  func.func @transform_4(%arg0: i32, %arg1: memref<64xi32, #tpu.memory_space<smem>>) -> (i32, i32) {
    %c0_i32 = arith.constant 0 : i32
    %c0_i32_0 = arith.constant 0 : i32
    %c0_i32_1 = arith.constant 0 : i32
    return %c0_i32, %c0_i32_0 : i32, i32
  }
  func.func @transform_5(%arg0: i32, %arg1: memref<64xi32, #tpu.memory_space<smem>>) -> (i32, i32) {
    %c0_i32 = arith.constant 0 : i32
    %c0_i32_0 = arith.constant 0 : i32
    %c0_i32_1 = arith.constant 0 : i32
    return %c0_i32, %c0_i32_0 : i32, i32
  }
  func.func @transform_6(%arg0: i32, %arg1: memref<64xi32, #tpu.memory_space<smem>>) -> (i32, i32) {
    %c0_i32 = arith.constant 0 : i32
    %c0_i32_0 = arith.constant 0 : i32
    return %arg0, %c0_i32 : i32, i32
  }
}

</mosaic_0001>

<llo_original>
// kernel: tpu_custom_call.1
$region0: #{tpu_custom_call.1}
  #allocation0 [shape = 'u32[]', space=smem, size = 0x4, offset = 0x4, fixed_abs, tag = 'smem constant byte address 0x4 - core index']
  #allocation1 [shape = 'u32[144,128]{1,0:T(1,128)}', space=vmem, size = 0x12000, scoped, tag = 'internal scratch']
  #allocation2 [shape = 'f32[2,8,768]{2,1,0:T(8,128)}', space=vmem, size = 0xc000, scoped, tag = 'scratch operand']
  #allocation3 [shape = 'f32[8,768]{1,0:T(8,128)}', space=vmem, size = 0x6000, scoped, tag = 'scratch operand']
  #allocation4 [shape = 's32[2]{0}', space=sflag, size = 0x8, scoped, tag = 'scratch operand']
  #allocation5 [shape = 's32[1]{0}', space=sflag, size = 0x4, scoped, tag = 'scoped memory for tpu_custom_call.1']
  #allocation6 [shape = 'u8[512]{0}', space=smem, size = 0x200, scoped, tag = 'prefetched SMEM operand 0']
  #allocation17 [shape = 's32[]', space=sflag, size = 0x4, offset = 0, fixed_abs, tag = 'sflag constant byte address 0x0 - dummy sync flag']
  #allocation18 [shape = 's32[]', space=sflag, size = 0x4, offset = 0, fixed_abs, tag = 'sflag constant byte address 0x0 - dummy sync flag']
  %s0 = inlined_call_operand.hbm [shape: s32[64], index: 0, kind: input, shape index: {}]
  %s1 = inlined_call_operand.hbm [shape: f32[8,8], index: 1, kind: input, shape index: {}]
  %s2 = inlined_call_operand.hbm [shape: f32[128,768], index: 2, kind: input, shape index: {}]
  %s3 = inlined_call_operand.hbm [shape: bf16[768,768], index: 3, kind: input, shape index: {}]
  %s4 = inlined_call_operand.hbm [shape: f32[1,768], index: 4, kind: input, shape index: {}]
  %s5 = inlined_call_operand.hbm [shape: bf16[768,128], index: 5, kind: input, shape index: {}]
  %s6 = inlined_call_operand.hbm [shape: f32[1,128], index: 6, kind: input, shape index: {}]
  %s7 = inlined_call_operand.hbm [shape: f32[8,128], index: 7, kind: output, shape index: {}]
  %s8 = sld [smem:[#allocation0]]
  $region82: #{tpu_custom_call.1} parent=0
    _
  %s10 = ssub.s32 1, %s8
  %s11 = scalar_select 0, %s10, %s8
  %13 = dma.hbm_to_smem %s0, 16, [#allocation6], [#allocation5]
  %14 = dma.done [#allocation5], 16
  %15 = sfence
  $region1: #{tpu_custom_call.1} parent=0
    #allocation7 [shape = 'u8[4096]{0}', space=vmem, size = 0x1000, scoped, tag = 'input window, operand 1, single buffered']
    #allocation8 [shape = 's32[1]{0}', space=sflag, size = 0x4, scoped, tag = 'scoped memory for tpu_custom_call.1']
    #allocation9 [shape = 's32[1]{0}', space=sflag, size = 0x4, scoped, tag = 'scoped memory for tpu_custom_call.1']
    #allocation10 [shape = 'u8[1179648]{0}', space=vmem, size = 0x120000, scoped, tag = 'input window, operand 3, single buffered']
    #allocation11 [shape = 's32[1]{0}', space=sflag, size = 0x4, scoped, tag = 'scoped memory for tpu_custom_call.1']
    #allocation12 [shape = 'u8[3072]{0}', space=vmem, size = 0xc00, scoped, tag = 'input window, operand 4, single buffered']
    #allocation13 [shape = 'u8[196608]{0}', space=vmem, size = 0x30000, scoped, tag = 'input window, operand 5, single buffered']
    #allocation14 [shape = 's32[1]{0}', space=sflag, size = 0x4, scoped, tag = 'scoped memory for tpu_custom_call.1']
    #allocation15 [shape = 'u8[512]{0}', space=vmem, size = 0x400, scoped, tag = 'input window, operand 6, single buffered']
    #allocation16 [shape = 'u8[4096]{0}', space=vmem, size = 0x1000, scoped, tag = 'output window, operand 0, single buffered']
    %16 = vsyncpa [#allocation8], 0
    %17 = vsyncpa [#allocation11], 0
    %18 = vsyncpa [#allocation14], 0
    %19 = vsyncpa [#allocation9], 0
    // Predicated region
    $region2: #{tpu_custom_call.1} parent=1 // pred_check
      _
    $region3: #{tpu_custom_call.1} parent=1 // pred_check_branch
      %21 = sbr.rel (0) target = $region5
    $region4: #{tpu_custom_call.1} parent=1 // pred_region
      %s23 = ssub.s32 128, 128
      %24 = vsyncadd [#allocation8], %s23
      %s26 = sshll.u32 [#allocation7], 4
      %s27 = int_to_ptr.vmem [resolvable:$true] %s26
      %29 = dma.hbm_to_vmem [thread:$0]  %s1, 128, %s27, [#allocation8]
    $region5: #{tpu_custom_call.1} parent=1 // pred_fallthru
      _
    // Predicated region
    $region6: #{tpu_custom_call.1} parent=1 // pred_check
      _
    $region7: #{tpu_custom_call.1} parent=1 // pred_check_branch
      %31 = sbr.rel (0) target = $region9
    $region8: #{tpu_custom_call.1} parent=1 // pred_region
      %s33 = ssub.s32 36864, 36864
      %34 = vsyncadd [#allocation11], %s33
      %s35 = sshll.u32 [#allocation10], 4
      %s36 = int_to_ptr.vmem [resolvable:$true] %s35
      %41 = dma.hbm_to_vmem [thread:$0]  %s3, 36864, %s36, [#allocation11], 384, 384, 24
    $region9: #{tpu_custom_call.1} parent=1 // pred_fallthru
      _
    // Predicated region
    $region10: #{tpu_custom_call.1} parent=1 // pred_check
      _
    $region11: #{tpu_custom_call.1} parent=1 // pred_check_branch
      %43 = sbr.rel (0) target = $region13
    $region12: #{tpu_custom_call.1} parent=1 // pred_region
      %s45 = ssub.s32 96, 96
      %46 = vsyncadd [#allocation11], %s45
      %s48 = sshll.u32 [#allocation12], 4
      %s49 = int_to_ptr.vmem [resolvable:$true] %s48
      %51 = dma.hbm_to_vmem [thread:$0]  %s4, 96, %s49, [#allocation11]
    $region13: #{tpu_custom_call.1} parent=1 // pred_fallthru
      _
    // Predicated region
    $region14: #{tpu_custom_call.1} parent=1 // pred_check
      _
    $region15: #{tpu_custom_call.1} parent=1 // pred_check_branch
      %53 = sbr.rel (0) target = $region17
    $region16: #{tpu_custom_call.1} parent=1 // pred_region
      %s55 = ssub.s32 6144, 6144
      %56 = vsyncadd [#allocation14], %s55
      %s57 = sshll.u32 [#allocation13], 4
      %s58 = int_to_ptr.vmem [resolvable:$true] %s57
      %63 = dma.hbm_to_vmem [thread:$0]  %s5, 6144, %s58, [#allocation14], 64, 64, 4
    $region17: #{tpu_custom_call.1} parent=1 // pred_fallthru
      _
    // Predicated region
    $region18: #{tpu_custom_call.1} parent=1 // pred_check
      _
    $region19: #{tpu_custom_call.1} parent=1 // pred_check_branch
      %65 = sbr.rel (0) target = $region21
    $region20: #{tpu_custom_call.1} parent=1 // pred_region
      %s67 = ssub.s32 16, 16
      %68 = vsyncadd [#allocation14], %s67
      %s70 = sshll.u32 [#allocation15], 4
      %s71 = int_to_ptr.vmem [resolvable:$true] %s70
      %73 = dma.hbm_to_vmem [thread:$0]  %s6, 16, %s71, [#allocation14]
    $region21: #{tpu_custom_call.1} parent=1 // pred_fallthru
      _
    // Predicated region
    $region22: #{tpu_custom_call.1} parent=1 // pred_check
      _
    $region23: #{tpu_custom_call.1} parent=1 // pred_check_branch
      %75 = sbr.rel (0) target = $region25
    $region24: #{tpu_custom_call.1} parent=1 // pred_region
      %76 = dma.done [#allocation8], 128
    $region25: #{tpu_custom_call.1} parent=1 // pred_fallthru
      _
    // Predicated region
    $region26: #{tpu_custom_call.1} parent=1 // pred_check
      _
    $region27: #{tpu_custom_call.1} parent=1 // pred_check_branch
      %78 = sbr.rel (0) target = $region29
    $region28: #{tpu_custom_call.1} parent=1 // pred_region
      %79 = dma.done [#allocation11], 36864
    $region29: #{tpu_custom_call.1} parent=1 // pred_fallthru
      _
    // Predicated region
    $region30: #{tpu_custom_call.1} parent=1 // pred_check
      _
    $region31: #{tpu_custom_call.1} parent=1 // pred_check_branch
      %81 = sbr.rel (0) target = $region33
    $region32: #{tpu_custom_call.1} parent=1 // pred_region
      %82 = dma.done [#allocation11], 96
    $region33: #{tpu_custom_call.1} parent=1 // pred_fallthru
      _
    // Predicated region
    $region34: #{tpu_custom_call.1} parent=1 // pred_check
      _
    $region35: #{tpu_custom_call.1} parent=1 // pred_check_branch
      %84 = sbr.rel (0) target = $region37
    $region36: #{tpu_custom_call.1} parent=1 // pred_region
      %85 = dma.done [#allocation14], 6144
    $region37: #{tpu_custom_call.1} parent=1 // pred_fallthru
      _
    // Predicated region
    $region38: #{tpu_custom_call.1} parent=1 // pred_check
      _
    $region39: #{tpu_custom_call.1} parent=1 // pred_check_branch
      %87 = sbr.rel (0) target = $region41
    $region40: #{tpu_custom_call.1} parent=1 // pred_region
      %88 = dma.done [#allocation14], 16
    $region41: #{tpu_custom_call.1} parent=1 // pred_fallthru
      _
    %s90 = smul.u32 0, 64
    loop: start=0, step=1, limit=8
    $region42: #{tpu_custom_call.1} parent=1 // loop_pre_header
      _
    $region43: #{tpu_custom_call.1} parent=1 // loop_header
      %s92 = sphi 0, %s96
      %p93 = scmp.ge.s32.totalorder %s92, 8
    $region44: #{tpu_custom_call.1} parent=1 // loop_header_branch
      %95 = sbr.rel (%p93) target = $region48
    $region45: #{tpu_custom_call.1} parent=1 // loop_body
      %s97 = sadd.s32 %s90, %s92
      %s98 = sld [smem:[#allocation6 + %s97]]
      %p99 = scmp.gt.s32.totalorder %s98, 0
      %s100 = scalar_select %p99, %s98, 0
      %p101 = scmp.lt.s32.totalorder %s100, 127
      %s102 = scalar_select %p101, %s100, 127
      %s103 = sshrl.u32 %s102, 3
      %s104 = sand.u32 %s102, 7
      %s105 = smul.u32 %s103, 48
      %s106 = sadd.s32 %s104, %s105
      %s107 = smul.addr %s106, 16
      %s108 = scalar_lea.hbm %s2, %s107
      %s109 = sshrl.u32 %s92, 3
      %s110 = sand.u32 %s92, 7
      %s111 = smul.u32 %s109, 48
      %s112 = sadd.s32 %s110, %s111
      %s113 = scalar_lea.vmem [#allocation2], %s112
      %s115 = sshll.u32 %s113, 4
      %s116 = int_to_ptr.vmem [resolvable:$true] %s115
      %118 = dma.hbm_to_vmem [thread:$0]  %s108, 96, %s116, [#allocation4], 128, 128, 1
    $region46: #{tpu_custom_call.1} parent=1 // loop_footer
      %s96 = sadd.s32 1, %s92
    $region47: #{tpu_custom_call.1} parent=1 // loop_footer_branch
      %91 = sbr.rel target = $region43
    $region48: #{tpu_custom_call.1} parent=1 // loop_exit
      _
    loop: start=0, step=1, limit=8
    $region49: #{tpu_custom_call.1} parent=1 // loop_pre_header
      _
    $region50: #{tpu_custom_call.1} parent=1 // loop_header
      %s120 = sphi 0, %s124
      %p121 = scmp.ge.s32.totalorder %s120, 8
    $region51: #{tpu_custom_call.1} parent=1 // loop_header_branch
      %123 = sbr.rel (%p121) target = $region55
    $region52: #{tpu_custom_call.1} parent=1 // loop_body
      %s125 = sand.u32 %s120, 1
      %s126 = sadd.s32 %s120, 1
      %p127 = scmp.lt.s32.totalorder %s126, 8
      // Predicated region
      $region56: #{tpu_custom_call.1} parent=52 // pred_check
        %p128 = pneg %p127
      $region57: #{tpu_custom_call.1} parent=52 // pred_check_branch
        %130 = sbr.rel (%p128) target = $region59
      $region58: #{tpu_custom_call.1} parent=52 // pred_region
        %s131 = ssub.s32 1, %s125
        loop: start=0, step=1, limit=8
        $region60: #{tpu_custom_call.1} parent=58 // loop_pre_header
          _
        $region61: #{tpu_custom_call.1} parent=58 // loop_header
          %s133 = sphi 0, %s137
          %p134 = scmp.ge.s32.totalorder %s133, 8
        $region62: #{tpu_custom_call.1} parent=58 // loop_header_branch
          %136 = sbr.rel (%p134) target = $region66
        $region63: #{tpu_custom_call.1} parent=58 // loop_body
          %s138 = smul.u32 %s126, 8
          %s139 = sadd.s32 %s90, %s138
          %s140 = sadd.s32 %s139, %s133
          %s141 = sld [smem:[#allocation6 + %s140]]
          %p142 = scmp.gt.s32.totalorder %s141, 0
          %s143 = scalar_select %p142, %s141, 0
          %p144 = scmp.lt.s32.totalorder %s143, 127
          %s145 = scalar_select %p144, %s143, 127
          %s146 = sshrl.u32 %s145, 3
          %s147 = sand.u32 %s145, 7
          %s148 = smul.u32 %s146, 48
          %s149 = sadd.s32 %s147, %s148
          %s150 = smul.addr %s149, 16
          %s151 = scalar_lea.hbm %s2, %s150
          %s152 = sshrl.u32 %s133, 3
          %s153 = sand.u32 %s133, 7
          %s154 = smul.u32 %s152, 48
          %s155 = sadd.s32 %s153, %s154
          %s156 = smul.u32 %s131, 48
          %s157 = sadd.s32 %s155, %s156
          %s158 = scalar_lea.vmem [#allocation2], %s157
          %s159 = scalar_lea.sflag [#allocation4], %s131
          %s161 = sshll.u32 %s158, 4
          %s162 = int_to_ptr.vmem [resolvable:$true] %s161
          %164 = dma.hbm_to_vmem [thread:$0]  %s151, 96, %s162, %s159, 128, 128, 1
        $region64: #{tpu_custom_call.1} parent=58 // loop_footer
          %s137 = sadd.s32 1, %s133
        $region65: #{tpu_custom_call.1} parent=58 // loop_footer_branch
          %132 = sbr.rel target = $region61
        $region66: #{tpu_custom_call.1} parent=58 // loop_exit
          _
      $region59: #{tpu_custom_call.1} parent=52 // pred_fallthru
        _
      loop: start=0, step=1, limit=8
      $region67: #{tpu_custom_call.1} parent=52 // loop_pre_header
        _
      $region68: #{tpu_custom_call.1} parent=52 // loop_header
        %s166 = sphi 0, %s170
        %p167 = scmp.ge.s32.totalorder %s166, 8
      $region69: #{tpu_custom_call.1} parent=52 // loop_header_branch
        %169 = sbr.rel (%p167) target = $region73
      $region70: #{tpu_custom_call.1} parent=52 // loop_body
        %s171 = scalar_lea.sflag [#allocation4], %s125
        %s172 = smul.u32 1, 6
        %s173 = sshll.u32 %s172, 4
        %174 = dma.done %s171, %s173
      $region71: #{tpu_custom_call.1} parent=52 // loop_footer
        %s170 = sadd.s32 1, %s166
      $region72: #{tpu_custom_call.1} parent=52 // loop_footer_branch
        %165 = sbr.rel target = $region68
      $region73: #{tpu_custom_call.1} parent=52 // loop_exit
        _
      %s175 = scalar_lea.vmem [#allocation7], %s120
      %v176 = vld [vmem:[%s175] sm:$0x1]
      %s177 = smul.u32 %s125, 6
      %s178 = smul.addr %s177, 8
      %s179 = scalar_lea.vmem [#allocation2], %s178
      %v180 = vld [vmem:[%s179] sm:$0xff]
      %v181 = vld [vmem:[%s179 + $0x8] sm:$0xff]
      %v182 = vld [vmem:[%s179 + $0x10] sm:$0xff]
      %v183 = vld [vmem:[%s179 + $0x18] sm:$0xff]
      %v184 = vld [vmem:[%s179 + $0x20] sm:$0xff]
      %v185 = vld [vmem:[%s179 + $0x28] sm:$0xff]
      %vm186 = vcmask 64512
      %v188 = vsel %vm186, %v176, 0
      %190 = vmatprep.subr.mxu0 0.0
      %191 = vmatpush1.msra.mxu0 0.0
      %192 = vmatprep.subr.mxu0 0.0
      %193 = vmatpush1.msra.mxu0 0.0
      %194 = vmatprep.subr.mxu0 0.0
      %195 = vmatpush1.msra.mxu0 0.0
      %196 = vmatprep.subr.mxu0 0.0
      %197 = vmatpush1.msra.mxu0 0.0
      %198 = vmatprep.subr.mxu0 0.0
      %199 = vmatpush1.msra.mxu0 0.0
      %200 = vmatprep.subr.mxu0 0.0
      %201 = vmatpush1.msra.mxu0 0.0
      %202 = vmatprep.subr.mxu0 0.0
      %203 = vmatpush1.msra.mxu0 0.0
      %204 = vmatprep.subr.mxu0 0.0
      %205 = vmatpush1.msra.mxu0 0.0
      %206 = vmatprep.subr.mxu0 0.0
      %207 = vmatpush1.msra.mxu0 0.0
      %208 = vmatprep.subr.mxu0 0.0
      %209 = vmatpush1.msra.mxu0 0.0
      %210 = vmatprep.subr.mxu0 0.0
      %211 = vmatpush1.msra.mxu0 0.0
      %212 = vmatprep.subr.mxu0 0.0
      %213 = vmatpush1.msra.mxu0 0.0
      %214 = vmatprep.subr.mxu0 0.0
      %215 = vmatpush1.msra.mxu0 0.0
      %216 = vmatprep.subr.mxu0 0.0
      %217 = vmatpush1.msra.mxu0 0.0
      %218 = vmatprep.subr.mxu0 0.0
      %219 = vmatpush1.msra.mxu0 0.0
      %220 = vmatprep.subr.mxu0 %v181
      %221 = vmatpush1.msra.mxu0 %v180
      %222 = vmatprep.subr.mxu0 0.0
      %223 = vmatpush2.msra.mxu0 0.0
      %224 = vmatprep.subr.mxu0 0.0
      %225 = vmatpush2.msra.mxu0 0.0
      %226 = vmatprep.subr.mxu0 0.0
      %227 = vmatpush2.msra.mxu0 0.0
      %228 = vmatprep.subr.mxu0 0.0
      %229 = vmatpush2.msra.mxu0 0.0
      %230 = vmatprep.subr.mxu0 0.0
      %231 = vmatpush2.msra.mxu0 0.0
      %232 = vmatprep.subr.mxu0 0.0
      %233 = vmatpush2.msra.mxu0 0.0
      %234 = vmatprep.subr.mxu0 0.0
      %235 = vmatpush2.msra.mxu0 0.0
      %236 = vmatprep.subr.mxu0 0.0
      %237 = vmatpush2.msra.mxu0 0.0
      %238 = vmatprep.subr.mxu0 0.0
      %239 = vmatpush2.msra.mxu0 0.0
      %240 = vmatprep.subr.mxu0 0.0
      %241 = vmatpush2.msra.mxu0 0.0
      %242 = vmatprep.subr.mxu0 0.0
      %243 = vmatpush2.msra.mxu0 0.0
      %244 = vmatprep.subr.mxu0 0.0
      %245 = vmatpush2.msra.mxu0 0.0
      %246 = vmatprep.subr.mxu0 0.0
      %247 = vmatpush2.msra.mxu0 0.0
      %248 = vmatprep.subr.mxu0 0.0
      %249 = vmatpush2.msra.mxu0 0.0
      %250 = vmatprep.subr.mxu0 0.0
      %251 = vmatpush2.msra.mxu0 0.0
      %252 = vmatprep.subr.mxu0 0.0
      %253 = vmatpush2.msra.mxu0 0.0
      %254 = vmatprep.mubr.f32.mxu0 0.0
      %255 = vmatmul.mubr.f32.gmra.mxu0 %v188
      %v256 = vpop.f32.mrf.mxu0
      %v257 = vadd.f32 0.0, %v256
      %v258 = vpop.f32.mrf.mxu0
      %v259 = vadd.f32 0.0, %v258
      %260 = vdwg.mxu0
      %261 = vmatprep.subr.mxu0 0.0
      %262 = vmatpush1.msra.mxu0 0.0
      %263 = vmatprep.subr.mxu0 0.0
      %264 = vmatpush1.msra.mxu0 0.0
      %265 = vmatprep.subr.mxu0 0.0
      %266 = vmatpush1.msra.mxu0 0.0
      %267 = vmatprep.subr.mxu0 0.0
      %268 = vmatpush1.msra.mxu0 0.0
      %269 = vmatprep.subr.mxu0 0.0
      %270 = vmatpush1.msra.mxu0 0.0
      %271 = vmatprep.subr.mxu0 0.0
      %272 = vmatpush1.msra.mxu0 0.0
      %273 = vmatprep.subr.mxu0 0.0
      %274 = vmatpush1.msra.mxu0 0.0
      %275 = vmatprep.subr.mxu0 0.0
      %276 = vmatpush1.msra.mxu0 0.0
      %277 = vmatprep.subr.mxu0 0.0
      %278 = vmatpush1.msra.mxu0 0.0
      %279 = vmatprep.subr.mxu0 0.0
      %280 = vmatpush1.msra.mxu0 0.0
      %281 = vmatprep.subr.mxu0 0.0
      %282 = vmatpush1.msra.mxu0 0.0
      %283 = vmatprep.subr.mxu0 0.0
      %284 = vmatpush1.msra.mxu0 0.0
      %285 = vmatprep.subr.mxu0 0.0
      %286 = vmatpush1.msra.mxu0 0.0
      %287 = vmatprep.subr.mxu0 0.0
      %288 = vmatpush1.msra.mxu0 0.0
      %289 = vmatprep.subr.mxu0 0.0
      %290 = vmatpush1.msra.mxu0 0.0
      %291 = vmatprep.subr.mxu0 %v183
      %292 = vmatpush1.msra.mxu0 %v182
      %293 = vmatprep.subr.mxu0 0.0
      %294 = vmatpush2.msra.mxu0 0.0
      %295 = vmatprep.subr.mxu0 0.0
      %296 = vmatpush2.msra.mxu0 0.0
      %297 = vmatprep.subr.mxu0 0.0
      %298 = vmatpush2.msra.mxu0 0.0
      %299 = vmatprep.subr.mxu0 0.0
      %300 = vmatpush2.msra.mxu0 0.0
      %301 = vmatprep.subr.mxu0 0.0
      %302 = vmatpush2.msra.mxu0 0.0
      %303 = vmatprep.subr.mxu0 0.0
      %304 = vmatpush2.msra.mxu0 0.0
      %305 = vmatprep.subr.mxu0 0.0
      %306 = vmatpush2.msra.mxu0 0.0
      %307 = vmatprep.subr.mxu0 0.0
      %308 = vmatpush2.msra.mxu0 0.0
      %309 = vmatprep.subr.mxu0 0.0
      %310 = vmatpush2.msra.mxu0 0.0
      %311 = vmatprep.subr.mxu0 0.0
      %312 = vmatpush2.msra.mxu0 0.0
      %313 = vmatprep.subr.mxu0 0.0
      %314 = vmatpush2.msra.mxu0 0.0
      %315 = vmatprep.subr.mxu0 0.0
      %316 = vmatpush2.msra.mxu0 0.0
      %317 = vmatprep.subr.mxu0 0.0
      %318 = vmatpush2.msra.mxu0 0.0
      %319 = vmatprep.subr.mxu0 0.0
      %320 = vmatpush2.msra.mxu0 0.0
      %321 = vmatprep.subr.mxu0 0.0
      %322 = vmatpush2.msra.mxu0 0.0
      %323 = vmatprep.subr.mxu0 0.0
      %324 = vmatpush2.msra.mxu0 0.0
      %325 = vmatprep.mubr.f32.mxu0 0.0
      %326 = vmatmul.mubr.f32.gmra.mxu0 %v188
      %v327 = vpop.f32.mrf.mxu0
      %v328 = vadd.f32 0.0, %v327
      %v329 = vpop.f32.mrf.mxu0
      %v330 = vadd.f32 0.0, %v329
      %331 = vdwg.mxu0
      %332 = vmatprep.subr.mxu0 0.0
      %333 = vmatpush1.msra.mxu0 0.0
      %334 = vmatprep.subr.mxu0 0.0
      %335 = vmatpush1.msra.mxu0 0.0
      %336 = vmatprep.subr.mxu0 0.0
      %337 = vmatpush1.msra.mxu0 0.0
      %338 = vmatprep.subr.mxu0 0.0
      %339 = vmatpush1.msra.mxu0 0.0
      %340 = vmatprep.subr.mxu0 0.0
      %341 = vmatpush1.msra.mxu0 0.0
      %342 = vmatprep.subr.mxu0 0.0
      %343 = vmatpush1.msra.mxu0 0.0
      %344 = vmatprep.subr.mxu0 0.0
      %345 = vmatpush1.msra.mxu0 0.0
      %346 = vmatprep.subr.mxu0 0.0
      %347 = vmatpush1.msra.mxu0 0.0
      %348 = vmatprep.subr.mxu0 0.0
      %349 = vmatpush1.msra.mxu0 0.0
      %350 = vmatprep.subr.mxu0 0.0
      %351 = vmatpush1.msra.mxu0 0.0
      %352 = vmatprep.subr.mxu0 0.0
      %353 = vmatpush1.msra.mxu0 0.0
      %354 = vmatprep.subr.mxu0 0.0
      %355 = vmatpush1.msra.mxu0 0.0
      %356 = vmatprep.subr.mxu0 0.0
      %357 = vmatpush1.msra.mxu0 0.0
      %358 = vmatprep.subr.mxu0 0.0
      %359 = vmatpush1.msra.mxu0 0.0
      %360 = vmatprep.subr.mxu0 0.0
      %361 = vmatpush1.msra.mxu0 0.0
      %362 = vmatprep.subr.mxu0 %v185
      %363 = vmatpush1.msra.mxu0 %v184
      %364 = vmatprep.subr.mxu0 0.0
      %365 = vmatpush2.msra.mxu0 0.0
      %366 = vmatprep.subr.mxu0 0.0
      %367 = vmatpush2.msra.mxu0 0.0
      %368 = vmatprep.subr.mxu0 0.0
      %369 = vmatpush2.msra.mxu0 0.0
      %370 = vmatprep.subr.mxu0 0.0
      %371 = vmatpush2.msra.mxu0 0.0
      %372 = vmatprep.subr.mxu0 0.0
      %373 = vmatpush2.msra.mxu0 0.0
      %374 = vmatprep.subr.mxu0 0.0
      %375 = vmatpush2.msra.mxu0 0.0
      %376 = vmatprep.subr.mxu0 0.0
      %377 = vmatpush2.msra.mxu0 0.0
      %378 = vmatprep.subr.mxu0 0.0
      %379 = vmatpush2.msra.mxu0 0.0
      %380 = vmatprep.subr.mxu0 0.0
      %381 = vmatpush2.msra.mxu0 0.0
      %382 = vmatprep.subr.mxu0 0.0
      %383 = vmatpush2.msra.mxu0 0.0
      %384 = vmatprep.subr.mxu0 0.0
      %385 = vmatpush2.msra.mxu0 0.0
      %386 = vmatprep.subr.mxu0 0.0
      %387 = vmatpush2.msra.mxu0 0.0
      %388 = vmatprep.subr.mxu0 0.0
      %389 = vmatpush2.msra.mxu0 0.0
      %390 = vmatprep.subr.mxu0 0.0
      %391 = vmatpush2.msra.mxu0 0.0
      %392 = vmatprep.subr.mxu0 0.0
      %393 = vmatpush2.msra.mxu0 0.0
      %394 = vmatprep.subr.mxu0 0.0
      %395 = vmatpush2.msra.mxu0 0.0
      %396 = vmatprep.mubr.f32.mxu0 0.0
      %397 = vmatmul.mubr.f32.gmra.mxu0 %v188
      %v398 = vpop.f32.mrf.mxu0
      %v399 = vadd.f32 0.0, %v398
      %v400 = vpop.f32.mrf.mxu0
      %v401 = vadd.f32 0.0, %v400
      %402 = vdwg.mxu0
      %v409 = vcombine.low %v257, %v259
      %v410 = vcombine.low %v328, %v330
      %v411 = vcombine.low %v399, %v401
      %v413 = vunpack.c.l.s4 1966171168
      %v414 = vunpack.c.0.s8 %v413
      %v415 = vlaneseq
      %v416 = vshrl.u32 %v415, 7
      %v417 = vsub.s32 %v414, %v416
      %v418 = vrot.slane %v409, %v417
      %v420 = vunpack.c.l.s4 1966171168
      %v421 = vunpack.c.0.s8 %v420
      %v422 = vlaneseq
      %v423 = vshrl.u32 %v422, 7
      %v424 = vsub.s32 %v421, %v423
      %v425 = vrot.slane %v410, %v424
      %v427 = vunpack.c.l.s4 1966171168
      %v428 = vunpack.c.0.s8 %v427
      %v429 = vlaneseq
      %v430 = vshrl.u32 %v429, 7
      %v431 = vsub.s32 %v428, %v430
      %v432 = vrot.slane %v411, %v431
      %v433 = vcombine.low %v418, %v425
      %v435 = vunpack.c.l.s4 1966171168
      %v436 = vunpack.c.0.s8 %v435
      %v437 = vlaneseq
      %v438 = vshrl.u32 %v437, 7
      %v439 = vsub.s32 %v436, %v438
      %v440 = vrot.slane %v433, %v439
      %v442 = vunpack.c.l.s4 1966171168
      %v443 = vunpack.c.0.s8 %v442
      %v444 = vlaneseq
      %v445 = vshrl.u32 %v444, 7
      %v446 = vsub.s32 %v443, %v445
      %v447 = vrot.slane %v432, %v446
      %v448 = vcombine.low %v440, %v447
      %v450 = vlaneseq
      %vm451 = vcmp.ge.s32.totalorder %v450, 0
      %vm452 = vcmp.lt.s32.totalorder %v450, 768
      %vm453 = vmand %vm451, %vm452
      %s454 = sshra.s32 %s120, 3
      %s455 = sand.u32 %s120, 7
      %s456 = sshra.s32 %s120, 3
      %s457 = sand.u32 %s120, 7
      %s458 = smul.u32 %s454, 6
      %s459 = smul.u32 %s458, 8
      %s460 = sadd.s32 %s459, %s457
      %s461 = scalar_lea.vmem [#allocation3], %s460
      %462 = vst.msk [vmem:[%s461] ss:$8 sm:$0xf] %vm453, %v448
      %463 = vst.msk [vmem:[%s461] ss:$8 sm:$0x30] %vm453, %v448
    $region53: #{tpu_custom_call.1} parent=1 // loop_footer
      %s124 = sadd.s32 1, %s120
    $region54: #{tpu_custom_call.1} parent=1 // loop_footer_branch
      %119 = sbr.rel target = $region50
    $region55: #{tpu_custom_call.1} parent=1 // loop_exit
      _
    %v464 = vld [vmem:[#allocation7] sm:$0xff]
    %vm465 = vcmask 64512
    %v466 = vsel %vm465, %v464, 0.0
    %467 = vadd.xlane.f32.xlu0 %v466
    %v468 = vpop.xlane.xlu0 %467
    %v469 = vmax.f32 %v468, 1.0
    %v470 = vld [vmem:[#allocation3] sm:$0xff]
    %v471 = vld [vmem:[#allocation3 + $0x8] sm:$0xff]
    %v472 = vld [vmem:[#allocation3 + $0x10] sm:$0xff]
    %v473 = vld [vmem:[#allocation3 + $0x18] sm:$0xff]
    %v474 = vld [vmem:[#allocation3 + $0x20] sm:$0xff]
    %v475 = vld [vmem:[#allocation3 + $0x28] sm:$0xff]
    %v476 = vrcp.pop %v469
    %v477 = vmul.f32 %v470, %v476
    %v478 = vmul.f32 %v471, %v476
    %v479 = vmul.f32 %v472, %v476
    %v480 = vmul.f32 %v473, %v476
    %v481 = vmul.f32 %v474, %v476
    %v482 = vmul.f32 %v475, %v476
    %v483 = vpack.c.bf16 %v477, %v477
    %v484 = vpack.c.bf16 %v478, %v478
    %v485 = vpack.c.bf16 %v479, %v479
    %v486 = vpack.c.bf16 %v480, %v480
    %v487 = vpack.c.bf16 %v481, %v481
    %v488 = vpack.c.bf16 %v482, %v482
    %v489 = vld [vmem:[#allocation10] sm:$0xff]
    %v490 = vld [vmem:[#allocation10 + $0x8] sm:$0xff]
    %v491 = vld [vmem:[#allocation10 + $0x10] sm:$0xff]
    %v492 = vld [vmem:[#allocation10 + $0x18] sm:$0xff]
    %v493 = vld [vmem:[#allocation10 + $0x20] sm:$0xff]
    %v494 = vld [vmem:[#allocation10 + $0x28] sm:$0xff]
    %v495 = vld [vmem:[#allocation10 + $0x30] sm:$0xff]
    %v496 = vld [vmem:[#allocation10 + $0x38] sm:$0xff]
    %v497 = vld [vmem:[#allocation10 + $0x40] sm:$0xff]
    %v498 = vld [vmem:[#allocation10 + $0x48] sm:$0xff]
    %v499 = vld [vmem:[#allocation10 + $0x50] sm:$0xff]
    %v500 = vld [vmem:[#allocation10 + $0x58] sm:$0xff]
    %v501 = vld [vmem:[#allocation10 + $0x60] sm:$0xff]
    %v502 = vld [vmem:[#allocation10 + $0x68] sm:$0xff]
    %v503 = vld [vmem:[#allocation10 + $0x70] sm:$0xff]
    %v504 = vld [vmem:[#allocation10 + $0x78] sm:$0xff]
    %v505 = vld [vmem:[#allocation10 + $0x80] sm:$0xff]
    %v506 = vld [vmem:[#allocation10 + $0x88] sm:$0xff]
    %v507 = vld [vmem:[#allocation10 + $0x90] sm:$0xff]
    %v508 = vld [vmem:[#allocation10 + $0x98] sm:$0xff]
    %v509 = vld [vmem:[#allocation10 + $0xa0] sm:$0xff]
    %v510 = vld [vmem:[#allocation10 + $0xa8] sm:$0xff]
    %v511 = vld [vmem:[#allocation10 + $0xb0] sm:$0xff]
    %v512 = vld [vmem:[#allocation10 + $0xb8] sm:$0xff]
    %v513 = vld [vmem:[#allocation10 + $0xc0] sm:$0xff]
    %v514 = vld [vmem:[#allocation10 + $0xc8] sm:$0xff]
    %v515 = vld [vmem:[#allocation10 + $0xd0] sm:$0xff]
    %v516 = vld [vmem:[#allocation10 + $0xd8] sm:$0xff]
    %v517 = vld [vmem:[#allocation10 + $0xe0] sm:$0xff]
    %v518 = vld [vmem:[#allocation10 + $0xe8] sm:$0xff]
    %v519 = vld [vmem:[#allocation10 + $0xf0] sm:$0xff]
    %v520 = vld [vmem:[#allocation10 + $0xf8] sm:$0xff]
    %v521 = vld [vmem:[#allocation10 + $0x100] sm:$0xff]
    %v522 = vld [vmem:[#allocation10 + $0x108] sm:$0xff]
    %v523 = vld [vmem:[#allocation10 + $0x110] sm:$0xff]
    %v524 = vld [vmem:[#allocation10 + $0x118] sm:$0xff]
    %v525 = vld [vmem:[#allocation10 + $0x120] sm:$0xff]
    %v526 = vld [vmem:[#allocation10 + $0x128] sm:$0xff]
    %v527 = vld [vmem:[#allocation10 + $0x130] sm:$0xff]
    %v528 = vld [vmem:[#allocation10 + $0x138] sm:$0xff]
    %v529 = vld [vmem:[#allocation10 + $0x140] sm:$0xff]
    %v530 = vld [vmem:[#allocation10 + $0x148] sm:$0xff]
    %v531 = vld [vmem:[#allocation10 + $0x150] sm:$0xff]
    %v532 = vld [vmem:[#allocation10 + $0x158] sm:$0xff]
    %v533 = vld [vmem:[#allocation10 + $0x160] sm:$0xff]
    %v534 = vld [vmem:[#allocation10 + $0x168] sm:$0xff]
    %v535 = vld [vmem:[#allocation10 + $0x170] sm:$0xff]
    %v536 = vld [vmem:[#allocation10 + $0x178] sm:$0xff]
    %v537 = vld [vmem:[#allocation10 + $0x180] sm:$0xff]
    %v538 = vld [vmem:[#allocation10 + $0x188] sm:$0xff]
    %v539 = vld [vmem:[#allocation10 + $0x190] sm:$0xff]
    %v540 = vld [vmem:[#allocation10 + $0x198] sm:$0xff]
    %v541 = vld [vmem:[#allocation10 + $0x1a0] sm:$0xff]
    %v542 = vld [vmem:[#allocation10 + $0x1a8] sm:$0xff]
    %v543 = vld [vmem:[#allocation10 + $0x1b0] sm:$0xff]
    %v544 = vld [vmem:[#allocation10 + $0x1b8] sm:$0xff]
    %v545 = vld [vmem:[#allocation10 + $0x1c0] sm:$0xff]
    %v546 = vld [vmem:[#allocation10 + $0x1c8] sm:$0xff]
    %v547 = vld [vmem:[#allocation10 + $0x1d0] sm:$0xff]
    %v548 = vld [vmem:[#allocation10 + $0x1d8] sm:$0xff]
    %v549 = vld [vmem:[#allocation10 + $0x1e0] sm:$0xff]
    %v550 = vld [vmem:[#allocation10 + $0x1e8] sm:$0xff]
    %v551 = vld [vmem:[#allocation10 + $0x1f0] sm:$0xff]
    %v552 = vld [vmem:[#allocation10 + $0x1f8] sm:$0xff]
    %v553 = vld [vmem:[#allocation10 + $0x200] sm:$0xff]
    %v554 = vld [vmem:[#allocation10 + $0x208] sm:$0xff]
    %v555 = vld [vmem:[#allocation10 + $0x210] sm:$0xff]
    %v556 = vld [vmem:[#allocation10 + $0x218] sm:$0xff]
    %v557 = vld [vmem:[#allocation10 + $0x220] sm:$0xff]
    %v558 = vld [vmem:[#allocation10 + $0x228] sm:$0xff]
    %v559 = vld [vmem:[#allocation10 + $0x230] sm:$0xff]
    %v560 = vld [vmem:[#allocation10 + $0x238] sm:$0xff]
    %v561 = vld [vmem:[#allocation10 + $0x240] sm:$0xff]
    %v562 = vld [vmem:[#allocation10 + $0x248] sm:$0xff]
    %v563 = vld [vmem:[#allocation10 + $0x250] sm:$0xff]
    %v564 = vld [vmem:[#allocation10 + $0x258] sm:$0xff]
    %v565 = vld [vmem:[#allocation10 + $0x260] sm:$0xff]
    %v566 = vld [vmem:[#allocation10 + $0x268] sm:$0xff]
    %v567 = vld [vmem:[#allocation10 + $0x270] sm:$0xff]
    %v568 = vld [vmem:[#allocation10 + $0x278] sm:$0xff]
    %v569 = vld [vmem:[#allocation10 + $0x280] sm:$0xff]
    %v570 = vld [vmem:[#allocation10 + $0x288] sm:$0xff]
    %v571 = vld [vmem:[#allocation10 + $0x290] sm:$0xff]
    %v572 = vld [vmem:[#allocation10 + $0x298] sm:$0xff]
    %v573 = vld [vmem:[#allocation10 + $0x2a0] sm:$0xff]
    %v574 = vld [vmem:[#allocation10 + $0x2a8] sm:$0xff]
    %v575 = vld [vmem:[#allocation10 + $0x2b0] sm:$0xff]
    %v576 = vld [vmem:[#allocation10 + $0x2b8] sm:$0xff]
    %v577 = vld [vmem:[#allocation10 + $0x2c0] sm:$0xff]
    %v578 = vld [vmem:[#allocation10 + $0x2c8] sm:$0xff]
    %v579 = vld [vmem:[#allocation10 + $0x2d0] sm:$0xff]
    %v580 = vld [vmem:[#allocation10 + $0x2d8] sm:$0xff]
    %v581 = vld [vmem:[#allocation10 + $0x2e0] sm:$0xff]
    %v582 = vld [vmem:[#allocation10 + $0x2e8] sm:$0xff]
    %v583 = vld [vmem:[#allocation10 + $0x2f0] sm:$0xff]
    %v584 = vld [vmem:[#allocation10 + $0x2f8] sm:$0xff]
    %v585 = vld [vmem:[#allocation10 + $0x300] sm:$0xff]
    %v586 = vld [vmem:[#allocation10 + $0x308] sm:$0xff]
    %v587 = vld [vmem:[#allocation10 + $0x310] sm:$0xff]
    %v588 = vld [vmem:[#allocation10 + $0x318] sm:$0xff]
    %v589 = vld [vmem:[#allocation10 + $0x320] sm:$0xff]
    %v590 = vld [vmem:[#allocation10 + $0x328] sm:$0xff]
    %v591 = vld [vmem:[#allocation10 + $0x330] sm:$0xff]
    %v592 = vld [vmem:[#allocation10 + $0x338] sm:$0xff]
    %v593 = vld [vmem:[#allocation10 + $0x340] sm:$0xff]
    %v594 = vld [vmem:[#allocation10 + $0x348] sm:$0xff]
    %v595 = vld [vmem:[#allocation10 + $0x350] sm:$0xff]
    %v596 = vld [vmem:[#allocation10 + $0x358] sm:$0xff]
    %v597 = vld [vmem:[#allocation10 + $0x360] sm:$0xff]
    %v598 = vld [vmem:[#allocation10 + $0x368] sm:$0xff]
    %v599 = vld [vmem:[#allocation10 + $0x370] sm:$0xff]
    %v600 = vld [vmem:[#allocation10 + $0x378] sm:$0xff]
    %v601 = vld [vmem:[#allocation10 + $0x380] sm:$0xff]
    %v602 = vld [vmem:[#allocation10 + $0x388] sm:$0xff]
    %v603 = vld [vmem:[#allocation10 + $0x390] sm:$0xff]
    %v604 = vld [vmem:[#allocation10 + $0x398] sm:$0xff]
    %v605 = vld [vmem:[#allocation10 + $0x3a0] sm:$0xff]
    %v606 = vld [vmem:[#allocation10 + $0x3a8] sm:$0xff]
    %v607 = vld [vmem:[#allocation10 + $0x3b0] sm:$0xff]
    %v608 = vld [vmem:[#allocation10 + $0x3b8] sm:$0xff]
    %v609 = vld [vmem:[#allocation10 + $0x3c0] sm:$0xff]
    %v610 = vld [vmem:[#allocation10 + $0x3c8] sm:$0xff]
    %v611 = vld [vmem:[#allocation10 + $0x3d0] sm:$0xff]
    %v612 = vld [vmem:[#allocation10 + $0x3d8] sm:$0xff]
    %v613 = vld [vmem:[#allocation10 + $0x3e0] sm:$0xff]
    %v614 = vld [vmem:[#allocation10 + $0x3e8] sm:$0xff]
    %v615 = vld [vmem:[#allocation10 + $0x3f0] sm:$0xff]
    %v616 = vld [vmem:[#allocation10 + $0x3f8] sm:$0xff]
    %v617 = vld [vmem:[#allocation10 + $0x400] sm:$0xff]
    %v618 = vld [vmem:[#allocation10 + $0x408] sm:$0xff]
    %v619 = vld [vmem:[#allocation10 + $0x410] sm:$0xff]
    %v620 = vld [vmem:[#allocation10 + $0x418] sm:$0xff]
    %v621 = vld [vmem:[#allocation10 + $0x420] sm:$0xff]
    %v622 = vld [vmem:[#allocation10 + $0x428] sm:$0xff]
    %v623 = vld [vmem:[#allocation10 + $0x430] sm:$0xff]
    %v624 = vld [vmem:[#allocation10 + $0x438] sm:$0xff]
    %v625 = vld [vmem:[#allocation10 + $0x440] sm:$0xff]
    %v626 = vld [vmem:[#allocation10 + $0x448] sm:$0xff]
    %v627 = vld [vmem:[#allocation10 + $0x450] sm:$0xff]
    %v628 = vld [vmem:[#allocation10 + $0x458] sm:$0xff]
    %v629 = vld [vmem:[#allocation10 + $0x460] sm:$0xff]
    %v630 = vld [vmem:[#allocation10 + $0x468] sm:$0xff]
    %v631 = vld [vmem:[#allocation10 + $0x470] sm:$0xff]
    %v632 = vld [vmem:[#allocation10 + $0x478] sm:$0xff]
    %v633 = vld [vmem:[#allocation10 + $0x480] sm:$0xff]
    %v634 = vld [vmem:[#allocation10 + $0x488] sm:$0xff]
    %v635 = vld [vmem:[#allocation10 + $0x490] sm:$0xff]
    %v636 = vld [vmem:[#allocation10 + $0x498] sm:$0xff]
    %v637 = vld [vmem:[#allocation10 + $0x4a0] sm:$0xff]
    %v638 = vld [vmem:[#allocation10 + $0x4a8] sm:$0xff]
    %v639 = vld [vmem:[#allocation10 + $0x4b0] sm:$0xff]
    %v640 = vld [vmem:[#allocation10 + $0x4b8] sm:$0xff]
    %v641 = vld [vmem:[#allocation10 + $0x4c0] sm:$0xff]
    %v642 = vld [vmem:[#allocation10 + $0x4c8] sm:$0xff]
    %v643 = vld [vmem:[#allocation10 + $0x4d0] sm:$0xff]
    %v644 = vld [vmem:[#allocation10 + $0x4d8] sm:$0xff]
    %v645 = vld [vmem:[#allocation10 + $0x4e0] sm:$0xff]
    %v646 = vld [vmem:[#allocation10 + $0x4e8] sm:$0xff]
    %v647 = vld [vmem:[#allocation10 + $0x4f0] sm:$0xff]
    %v648 = vld [vmem:[#allocation10 + $0x4f8] sm:$0xff]
    %v649 = vld [vmem:[#allocation10 + $0x500] sm:$0xff]
    %v650 = vld [vmem:[#allocation10 + $0x508] sm:$0xff]
    %v651 = vld [vmem:[#allocation10 + $0x510] sm:$0xff]
    %v652 = vld [vmem:[#allocation10 + $0x518] sm:$0xff]
    %v653 = vld [vmem:[#allocation10 + $0x520] sm:$0xff]
    %v654 = vld [vmem:[#allocation10 + $0x528] sm:$0xff]
    %v655 = vld [vmem:[#allocation10 + $0x530] sm:$0xff]
    %v656 = vld [vmem:[#allocation10 + $0x538] sm:$0xff]
    %v657 = vld [vmem:[#allocation10 + $0x540] sm:$0xff]
    %v658 = vld [vmem:[#allocation10 + $0x548] sm:$0xff]
    %v659 = vld [vmem:[#allocation10 + $0x550] sm:$0xff]
    %v660 = vld [vmem:[#allocation10 + $0x558] sm:$0xff]
    %v661 = vld [vmem:[#allocation10 + $0x560] sm:$0xff]
    %v662 = vld [vmem:[#allocation10 + $0x568] sm:$0xff]
    %v663 = vld [vmem:[#allocation10 + $0x570] sm:$0xff]
    %v664 = vld [vmem:[#allocation10 + $0x578] sm:$0xff]
    %v665 = vld [vmem:[#allocation10 + $0x580] sm:$0xff]
    %v666 = vld [vmem:[#allocation10 + $0x588] sm:$0xff]
    %v667 = vld [vmem:[#allocation10 + $0x590] sm:$0xff]
    %v668 = vld [vmem:[#allocation10 + $0x598] sm:$0xff]
    %v669 = vld [vmem:[#allocation10 + $0x5a0] sm:$0xff]
    %v670 = vld [vmem:[#allocation10 + $0x5a8] sm:$0xff]
    %v671 = vld [vmem:[#allocation10 + $0x5b0] sm:$0xff]
    %v672 = vld [vmem:[#allocation10 + $0x5b8] sm:$0xff]
    %v673 = vld [vmem:[#allocation10 + $0x5c0] sm:$0xff]
    %v674 = vld [vmem:[#allocation10 + $0x5c8] sm:$0xff]
    %v675 = vld [vmem:[#allocation10 + $0x5d0] sm:$0xff]
    %v676 = vld [vmem:[#allocation10 + $0x5d8] sm:$0xff]
    %v677 = vld [vmem:[#allocation10 + $0x5e0] sm:$0xff]
    %v678 = vld [vmem:[#allocation10 + $0x5e8] sm:$0xff]
    %v679 = vld [vmem:[#allocation10 + $0x5f0] sm:$0xff]
    %v680 = vld [vmem:[#allocation10 + $0x5f8] sm:$0xff]
    %v681 = vld [vmem:[#allocation10 + $0x600] sm:$0xff]
    %v682 = vld [vmem:[#allocation10 + $0x608] sm:$0xff]
    %v683 = vld [vmem:[#allocation10 + $0x610] sm:$0xff]
    %v684 = vld [vmem:[#allocation10 + $0x618] sm:$0xff]
    %v685 = vld [vmem:[#allocation10 + $0x620] sm:$0xff]
    %v686 = vld [vmem:[#allocation10 + $0x628] sm:$0xff]
    %v687 = vld [vmem:[#allocation10 + $0x630] sm:$0xff]
    %v688 = vld [vmem:[#allocation10 + $0x638] sm:$0xff]
    %v689 = vld [vmem:[#allocation10 + $0x640] sm:$0xff]
    %v690 = vld [vmem:[#allocation10 + $0x648] sm:$0xff]
    %v691 = vld [vmem:[#allocation10 + $0x650] sm:$0xff]
    %v692 = vld [vmem:[#allocation10 + $0x658] sm:$0xff]
    %v693 = vld [vmem:[#allocation10 + $0x660] sm:$0xff]
    %v694 = vld [vmem:[#allocation10 + $0x668] sm:$0xff]
    %v695 = vld [vmem:[#allocation10 + $0x670] sm:$0xff]
    %v696 = vld [vmem:[#allocation10 + $0x678] sm:$0xff]
    %v697 = vld [vmem:[#allocation10 + $0x680] sm:$0xff]
    %v698 = vld [vmem:[#allocation10 + $0x688] sm:$0xff]
    %v699 = vld [vmem:[#allocation10 + $0x690] sm:$0xff]
    %v700 = vld [vmem:[#allocation10 + $0x698] sm:$0xff]
    %v701 = vld [vmem:[#allocation10 + $0x6a0] sm:$0xff]
    %v702 = vld [vmem:[#allocation10 + $0x6a8] sm:$0xff]
    %v703 = vld [vmem:[#allocation10 + $0x6b0] sm:$0xff]
    %v704 = vld [vmem:[#allocation10 + $0x6b8] sm:$0xff]
    %v705 = vld [vmem:[#allocation10 + $0x6c0] sm:$0xff]
    %v706 = vld [vmem:[#allocation10 + $0x6c8] sm:$0xff]
    %v707 = vld [vmem:[#allocation10 + $0x6d0] sm:$0xff]
    %v708 = vld [vmem:[#allocation10 + $0x6d8] sm:$0xff]
    %v709 = vld [vmem:[#allocation10 + $0x6e0] sm:$0xff]
    %v710 = vld [vmem:[#allocation10 + $0x6e8] sm:$0xff]
    %v711 = vld [vmem:[#allocation10 + $0x6f0] sm:$0xff]
    %v712 = vld [vmem:[#allocation10 + $0x6f8] sm:$0xff]
    %v713 = vld [vmem:[#allocation10 + $0x700] sm:$0xff]
    %v714 = vld [vmem:[#allocation10 + $0x708] sm:$0xff]
    %v715 = vld [vmem:[#allocation10 + $0x710] sm:$0xff]
    %v716 = vld [vmem:[#allocation10 + $0x718] sm:$0xff]
    %v717 = vld [vmem:[#allocation10 + $0x720] sm:$0xff]
    %v718 = vld [vmem:[#allocation10 + $0x728] sm:$0xff]
    %v719 = vld [vmem:[#allocation10 + $0x730] sm:$0xff]
    %v720 = vld [vmem:[#allocation10 + $0x738] sm:$0xff]
    %v721 = vld [vmem:[#allocation10 + $0x740] sm:$0xff]
    %v722 = vld [vmem:[#allocation10 + $0x748] sm:$0xff]
    %v723 = vld [vmem:[#allocation10 + $0x750] sm:$0xff]
    %v724 = vld [vmem:[#allocation10 + $0x758] sm:$0xff]
    %v725 = vld [vmem:[#allocation10 + $0x760] sm:$0xff]
    %v726 = vld [vmem:[#allocation10 + $0x768] sm:$0xff]
    %v727 = vld [vmem:[#allocation10 + $0x770] sm:$0xff]
    %v728 = vld [vmem:[#allocation10 + $0x778] sm:$0xff]
    %v729 = vld [vmem:[#allocation10 + $0x780] sm:$0xff]
    %v730 = vld [vmem:[#allocation10 + $0x788] sm:$0xff]
    %v731 = vld [vmem:[#allocation10 + $0x790] sm:$0xff]
    %v732 = vld [vmem:[#allocation10 + $0x798] sm:$0xff]
    %v733 = vld [vmem:[#allocation10 + $0x7a0] sm:$0xff]
    %v734 = vld [vmem:[#allocation10 + $0x7a8] sm:$0xff]
    %v735 = vld [vmem:[#allocation10 + $0x7b0] sm:$0xff]
    %v736 = vld [vmem:[#allocation10 + $0x7b8] sm:$0xff]
    %v737 = vld [vmem:[#allocation10 + $0x7c0] sm:$0xff]
    %v738 = vld [vmem:[#allocation10 + $0x7c8] sm:$0xff]
    %v739 = vld [vmem:[#allocation10 + $0x7d0] sm:$0xff]
    %v740 = vld [vmem:[#allocation10 + $0x7d8] sm:$0xff]
    %v741 = vld [vmem:[#allocation10 + $0x7e0] sm:$0xff]
    %v742 = vld [vmem:[#allocation10 + $0x7e8] sm:$0xff]
    %v743 = vld [vmem:[#allocation10 + $0x7f0] sm:$0xff]
    %v744 = vld [vmem:[#allocation10 + $0x7f8] sm:$0xff]
    %v745 = vld [vmem:[#allocation10 + $0x800] sm:$0xff]
    %v746 = vld [vmem:[#allocation10 + $0x808] sm:$0xff]
    %v747 = vld [vmem:[#allocation10 + $0x810] sm:$0xff]
    %v748 = vld [vmem:[#allocation10 + $0x818] sm:$0xff]
    %v749 = vld [vmem:[#allocation10 + $0x820] sm:$0xff]
    %v750 = vld [vmem:[#allocation10 + $0x828] sm:$0xff]
    %v751 = vld [vmem:[#allocation10 + $0x830] sm:$0xff]
    %v752 = vld [vmem:[#allocation10 + $0x838] sm:$0xff]
    %v753 = vld [vmem:[#allocation10 + $0x840] sm:$0xff]
    %v754 = vld [vmem:[#allocation10 + $0x848] sm:$0xff]
    %v755 = vld [vmem:[#allocation10 + $0x850] sm:$0xff]
    %v756 = vld [vmem:[#allocation10 + $0x858] sm:$0xff]
    %v757 = vld [vmem:[#allocation10 + $0x860] sm:$0xff]
    %v758 = vld [vmem:[#allocation10 + $0x868] sm:$0xff]
    %v759 = vld [vmem:[#allocation10 + $0x870] sm:$0xff]
    %v760 = vld [vmem:[#allocation10 + $0x878] sm:$0xff]
    %v761 = vld [vmem:[#allocation10 + $0x880] sm:$0xff]
    %v762 = vld [vmem:[#allocation10 + $0x888] sm:$0xff]
    %v763 = vld [vmem:[#allocation10 + $0x890] sm:$0xff]
    %v764 = vld [vmem:[#allocation10 + $0x898] sm:$0xff]
    %v765 = vld [vmem:[#allocation10 + $0x8a0] sm:$0xff]
    %v766 = vld [vmem:[#allocation10 + $0x8a8] sm:$0xff]
    %v767 = vld [vmem:[#allocation10 + $0x8b0] sm:$0xff]
    %v768 = vld [vmem:[#allocation10 + $0x8b8] sm:$0xff]
    %v769 = vld [vmem:[#allocation10 + $0x8c0] sm:$0xff]
    %v770 = vld [vmem:[#allocation10 + $0x8c8] sm:$0xff]
    %v771 = vld [vmem:[#allocation10 + $0x8d0] sm:$0xff]
    %v772 = vld [vmem:[#allocation10 + $0x8d8] sm:$0xff]
    %v773 = vld [vmem:[#allocation10 + $0x8e0] sm:$0xff]
    %v774 = vld [vmem:[#allocation10 + $0x8e8] sm:$0xff]
    %v775 = vld [vmem:[#allocation10 + $0x8f0] sm:$0xff]
    %v776 = vld [vmem:[#allocation10 + $0x8f8] sm:$0xff]
    %v777 = vld [vmem:[#allocation12] sm:$0x3f]
    %v779 = vlaneseq
    %v780 = vshrl.u32 %v779, 7
    %v781 = vsub.s32 0, %v780
    %v782 = vrot.slane %v777, %v781
    %v783 = vlaneseq
    %v784 = vshrl.u32 %v783, 7
    %v785 = vsub.s32 1, %v784
    %v786 = vrot.slane %v777, %v785
    %v787 = vlaneseq
    %v788 = vshrl.u32 %v787, 7
    %v789 = vsub.s32 2, %v788
    %v790 = vrot.slane %v777, %v789
    %v791 = vlaneseq
    %v792 = vshrl.u32 %v791, 7
    %v793 = vsub.s32 3, %v792
    %v794 = vrot.slane %v777, %v793
    %v795 = vlaneseq
    %v796 = vshrl.u32 %v795, 7
    %v797 = vsub.s32 4, %v796
    %v798 = vrot.slane %v777, %v797
    %v799 = vlaneseq
    %v800 = vshrl.u32 %v799, 7
    %v801 = vsub.s32 5, %v800
    %v802 = vrot.slane %v777, %v801
    %v1097 = vunpack.c.l.b16 %v489
    %v1098 = vunpack.c.h.b16 %v489
    %v1099 = vunpack.c.l.b16 %v490
    %v1100 = vunpack.c.h.b16 %v490
    %v1101 = vunpack.c.l.b16 %v491
    %v1102 = vunpack.c.h.b16 %v491
    %v1103 = vunpack.c.l.b16 %v492
    %v1104 = vunpack.c.h.b16 %v492
    %v1105 = vunpack.c.l.b16 %v493
    %v1106 = vunpack.c.h.b16 %v493
    %v1107 = vunpack.c.l.b16 %v494
    %v1108 = vunpack.c.h.b16 %v494
    %v1109 = vunpack.c.l.b16 %v495
    %v1110 = vunpack.c.h.b16 %v495
    %v1111 = vunpack.c.l.b16 %v496
    %v1112 = vunpack.c.h.b16 %v496
    %v1113 = vunpack.c.l.b16 %v497
    %v1114 = vunpack.c.h.b16 %v497
    %v1115 = vunpack.c.l.b16 %v498
    %v1116 = vunpack.c.h.b16 %v498
    %v1117 = vunpack.c.l.b16 %v499
    %v1118 = vunpack.c.h.b16 %v499
    %v1119 = vunpack.c.l.b16 %v500
    %v1120 = vunpack.c.h.b16 %v500
    %v1121 = vunpack.c.l.b16 %v501
    %v1122 = vunpack.c.h.b16 %v501
    %v1123 = vunpack.c.l.b16 %v502
    %v1124 = vunpack.c.h.b16 %v502
    %v1125 = vunpack.c.l.b16 %v503
    %v1126 = vunpack.c.h.b16 %v503
    %v1127 = vunpack.c.l.b16 %v504
    %v1128 = vunpack.c.h.b16 %v504
    %v1129 = vunpack.c.l.b16 %v505
    %v1130 = vunpack.c.h.b16 %v505
    %v1131 = vunpack.c.l.b16 %v506
    %v1132 = vunpack.c.h.b16 %v506
    %v1133 = vunpack.c.l.b16 %v507
    %v1134 = vunpack.c.h.b16 %v507
    %v1135 = vunpack.c.l.b16 %v508
    %v1136 = vunpack.c.h.b16 %v508
    %v1137 = vunpack.c.l.b16 %v509
    %v1138 = vunpack.c.h.b16 %v509
    %v1139 = vunpack.c.l.b16 %v510
    %v1140 = vunpack.c.h.b16 %v510
    %v1141 = vunpack.c.l.b16 %v511
    %v1142 = vunpack.c.h.b16 %v511
    %v1143 = vunpack.c.l.b16 %v512
    %v1144 = vunpack.c.h.b16 %v512
    %v1145 = vunpack.c.l.b16 %v513
    %v1146 = vunpack.c.h.b16 %v513
    %v1147 = vunpack.c.l.b16 %v514
    %v1148 = vunpack.c.h.b16 %v514
    %v1149 = vunpack.c.l.b16 %v515
    %v1150 = vunpack.c.h.b16 %v515
    %v1151 = vunpack.c.l.b16 %v516
    %v1152 = vunpack.c.h.b16 %v516
    %v1153 = vunpack.c.l.b16 %v517
    %v1154 = vunpack.c.h.b16 %v517
    %v1155 = vunpack.c.l.b16 %v518
    %v1156 = vunpack.c.h.b16 %v518
    %v1157 = vunpack.c.l.b16 %v519
    %v1158 = vunpack.c.h.b16 %v519
    %v1159 = vunpack.c.l.b16 %v520
    %v1160 = vunpack.c.h.b16 %v520
    %v1161 = vunpack.c.l.b16 %v521
    %v1162 = vunpack.c.h.b16 %v521
    %v1163 = vunpack.c.l.b16 %v522
    %v1164 = vunpack.c.h.b16 %v522
    %v1165 = vunpack.c.l.b16 %v523
    %v1166 = vunpack.c.h.b16 %v523
    %v1167 = vunpack.c.l.b16 %v524
    %v1168 = vunpack.c.h.b16 %v524
    %v1169 = vunpack.c.l.b16 %v525
    %v1170 = vunpack.c.h.b16 %v525
    %v1171 = vunpack.c.l.b16 %v526
    %v1172 = vunpack.c.h.b16 %v526
    %v1173 = vunpack.c.l.b16 %v527
    %v1174 = vunpack.c.h.b16 %v527
    %v1175 = vunpack.c.l.b16 %v528
    %v1176 = vunpack.c.h.b16 %v528
    %v1177 = vunpack.c.l.b16 %v529
    %v1178 = vunpack.c.h.b16 %v529
    %v1179 = vunpack.c.l.b16 %v530
    %v1180 = vunpack.c.h.b16 %v530
    %v1181 = vunpack.c.l.b16 %v531
    %v1182 = vunpack.c.h.b16 %v531
    %v1183 = vunpack.c.l.b16 %v532
    %v1184 = vunpack.c.h.b16 %v532
    %v1185 = vunpack.c.l.b16 %v533
    %v1186 = vunpack.c.h.b16 %v533
    %v1187 = vunpack.c.l.b16 %v534
    %v1188 = vunpack.c.h.b16 %v534
    %v1189 = vunpack.c.l.b16 %v535
    %v1190 = vunpack.c.h.b16 %v535
    %v1191 = vunpack.c.l.b16 %v536
    %v1192 = vunpack.c.h.b16 %v536
    %v1193 = vunpack.c.l.b16 %v537
    %v1194 = vunpack.c.h.b16 %v537
    %v1195 = vunpack.c.l.b16 %v538
    %v1196 = vunpack.c.h.b16 %v538
    %v1197 = vunpack.c.l.b16 %v539
    %v1198 = vunpack.c.h.b16 %v539
    %v1199 = vunpack.c.l.b16 %v540
    %v1200 = vunpack.c.h.b16 %v540
    %v1201 = vunpack.c.l.b16 %v541
    %v1202 = vunpack.c.h.b16 %v541
    %v1203 = vunpack.c.l.b16 %v542
    %v1204 = vunpack.c.h.b16 %v542
    %v1205 = vunpack.c.l.b16 %v543
    %v1206 = vunpack.c.h.b16 %v543
    %v1207 = vunpack.c.l.b16 %v544
    %v1208 = vunpack.c.h.b16 %v544
    %v1209 = vunpack.c.l.b16 %v545
    %v1210 = vunpack.c.h.b16 %v545
    %v1211 = vunpack.c.l.b16 %v546
    %v1212 = vunpack.c.h.b16 %v546
    %v1213 = vunpack.c.l.b16 %v547
    %v1214 = vunpack.c.h.b16 %v547
    %v1215 = vunpack.c.l.b16 %v548
    %v1216 = vunpack.c.h.b16 %v548
    %v1217 = vunpack.c.l.b16 %v549
    %v1218 = vunpack.c.h.b16 %v549
    %v1219 = vunpack.c.l.b16 %v550
    %v1220 = vunpack.c.h.b16 %v550
    %v1221 = vunpack.c.l.b16 %v551
    %v1222 = vunpack.c.h.b16 %v551
    %v1223 = vunpack.c.l.b16 %v552
    %v1224 = vunpack.c.h.b16 %v552
    %v1225 = vunpack.c.l.b16 %v553
    %v1226 = vunpack.c.h.b16 %v553
    %v1227 = vunpack.c.l.b16 %v554
    %v1228 = vunpack.c.h.b16 %v554
    %v1229 = vunpack.c.l.b16 %v555
    %v1230 = vunpack.c.h.b16 %v555
    %v1231 = vunpack.c.l.b16 %v556
    %v1232 = vunpack.c.h.b16 %v556
    %v1233 = vunpack.c.l.b16 %v557
    %v1234 = vunpack.c.h.b16 %v557
    %v1235 = vunpack.c.l.b16 %v558
    %v1236 = vunpack.c.h.b16 %v558
    %v1237 = vunpack.c.l.b16 %v559
    %v1238 = vunpack.c.h.b16 %v559
    %v1239 = vunpack.c.l.b16 %v560
    %v1240 = vunpack.c.h.b16 %v560
    %v1241 = vunpack.c.l.b16 %v561
    %v1242 = vunpack.c.h.b16 %v561
    %v1243 = vunpack.c.l.b16 %v562
    %v1244 = vunpack.c.h.b16 %v562
    %v1245 = vunpack.c.l.b16 %v563
    %v1246 = vunpack.c.h.b16 %v563
    %v1247 = vunpack.c.l.b16 %v564
    %v1248 = vunpack.c.h.b16 %v564
    %v1249 = vunpack.c.l.b16 %v565
    %v1250 = vunpack.c.h.b16 %v565
    %v1251 = vunpack.c.l.b16 %v566
    %v1252 = vunpack.c.h.b16 %v566
    %v1253 = vunpack.c.l.b16 %v567
    %v1254 = vunpack.c.h.b16 %v567
    %v1255 = vunpack.c.l.b16 %v568
    %v1256 = vunpack.c.h.b16 %v568
    %v1257 = vunpack.c.l.b16 %v569
    %v1258 = vunpack.c.h.b16 %v569
    %v1259 = vunpack.c.l.b16 %v570
    %v1260 = vunpack.c.h.b16 %v570
    %v1261 = vunpack.c.l.b16 %v571
    %v1262 = vunpack.c.h.b16 %v571
    %v1263 = vunpack.c.l.b16 %v572
    %v1264 = vunpack.c.h.b16 %v572
    %v1265 = vunpack.c.l.b16 %v573
    %v1266 = vunpack.c.h.b16 %v573
    %v1267 = vunpack.c.l.b16 %v574
    %v1268 = vunpack.c.h.b16 %v574
    %v1269 = vunpack.c.l.b16 %v575
    %v1270 = vunpack.c.h.b16 %v575
    %v1271 = vunpack.c.l.b16 %v576
    %v1272 = vunpack.c.h.b16 %v576
    %v1273 = vunpack.c.l.b16 %v577
    %v1274 = vunpack.c.h.b16 %v577
    %v1275 = vunpack.c.l.b16 %v578
    %v1276 = vunpack.c.h.b16 %v578
    %v1277 = vunpack.c.l.b16 %v579
    %v1278 = vunpack.c.h.b16 %v579
    %v1279 = vunpack.c.l.b16 %v580
    %v1280 = vunpack.c.h.b16 %v580
    %v1281 = vunpack.c.l.b16 %v581
    %v1282 = vunpack.c.h.b16 %v581
    %v1283 = vunpack.c.l.b16 %v582
    %v1284 = vunpack.c.h.b16 %v582
    %v1285 = vunpack.c.l.b16 %v583
    %v1286 = vunpack.c.h.b16 %v583
    %v1287 = vunpack.c.l.b16 %v584
    %v1288 = vunpack.c.h.b16 %v584
    %v1289 = vunpack.c.l.b16 %v585
    %v1290 = vunpack.c.h.b16 %v585
    %v1291 = vunpack.c.l.b16 %v586
    %v1292 = vunpack.c.h.b16 %v586
    %v1293 = vunpack.c.l.b16 %v587
    %v1294 = vunpack.c.h.b16 %v587
    %v1295 = vunpack.c.l.b16 %v588
    %v1296 = vunpack.c.h.b16 %v588
    %v1297 = vunpack.c.l.b16 %v589
    %v1298 = vunpack.c.h.b16 %v589
    %v1299 = vunpack.c.l.b16 %v590
    %v1300 = vunpack.c.h.b16 %v590
    %v1301 = vunpack.c.l.b16 %v591
    %v1302 = vunpack.c.h.b16 %v591
    %v1303 = vunpack.c.l.b16 %v592
    %v1304 = vunpack.c.h.b16 %v592
    %v1305 = vunpack.c.l.b16 %v593
    %v1306 = vunpack.c.h.b16 %v593
    %v1307 = vunpack.c.l.b16 %v594
    %v1308 = vunpack.c.h.b16 %v594
    %v1309 = vunpack.c.l.b16 %v595
    %v1310 = vunpack.c.h.b16 %v595
    %v1311 = vunpack.c.l.b16 %v596
    %v1312 = vunpack.c.h.b16 %v596
    %v1313 = vunpack.c.l.b16 %v597
    %v1314 = vunpack.c.h.b16 %v597
    %v1315 = vunpack.c.l.b16 %v598
    %v1316 = vunpack.c.h.b16 %v598
    %v1317 = vunpack.c.l.b16 %v599
    %v1318 = vunpack.c.h.b16 %v599
    %v1319 = vunpack.c.l.b16 %v600
    %v1320 = vunpack.c.h.b16 %v600
    %v1321 = vunpack.c.l.b16 %v601
    %v1322 = vunpack.c.h.b16 %v601
    %v1323 = vunpack.c.l.b16 %v602
    %v1324 = vunpack.c.h.b16 %v602
    %v1325 = vunpack.c.l.b16 %v603
    %v1326 = vunpack.c.h.b16 %v603
    %v1327 = vunpack.c.l.b16 %v604
    %v1328 = vunpack.c.h.b16 %v604
    %v1329 = vunpack.c.l.b16 %v605
    %v1330 = vunpack.c.h.b16 %v605
    %v1331 = vunpack.c.l.b16 %v606
    %v1332 = vunpack.c.h.b16 %v606
    %v1333 = vunpack.c.l.b16 %v607
    %v1334 = vunpack.c.h.b16 %v607
    %v1335 = vunpack.c.l.b16 %v608
    %v1336 = vunpack.c.h.b16 %v608
    %v1337 = vunpack.c.l.b16 %v609
    %v1338 = vunpack.c.h.b16 %v609
    %v1339 = vunpack.c.l.b16 %v610
    %v1340 = vunpack.c.h.b16 %v610
    %v1341 = vunpack.c.l.b16 %v611
    %v1342 = vunpack.c.h.b16 %v611
    %v1343 = vunpack.c.l.b16 %v612
    %v1344 = vunpack.c.h.b16 %v612
    %v1345 = vunpack.c.l.b16 %v613
    %v1346 = vunpack.c.h.b16 %v613
    %v1347 = vunpack.c.l.b16 %v614
    %v1348 = vunpack.c.h.b16 %v614
    %v1349 = vunpack.c.l.b16 %v615
    %v1350 = vunpack.c.h.b16 %v615
    %v1351 = vunpack.c.l.b16 %v616
    %v1352 = vunpack.c.h.b16 %v616
    %v1353 = vunpack.c.l.b16 %v617
    %v1354 = vunpack.c.h.b16 %v617
    %v1355 = vunpack.c.l.b16 %v618
    %v1356 = vunpack.c.h.b16 %v618
    %v1357 = vunpack.c.l.b16 %v619
    %v1358 = vunpack.c.h.b16 %v619
    %v1359 = vunpack.c.l.b16 %v620
    %v1360 = vunpack.c.h.b16 %v620
    %v1361 = vunpack.c.l.b16 %v621
    %v1362 = vunpack.c.h.b16 %v621
    %v1363 = vunpack.c.l.b16 %v622
    %v1364 = vunpack.c.h.b16 %v622
    %v1365 = vunpack.c.l.b16 %v623
    %v1366 = vunpack.c.h.b16 %v623
    %v1367 = vunpack.c.l.b16 %v624
    %v1368 = vunpack.c.h.b16 %v624
    %v1369 = vunpack.c.l.b16 %v625
    %v1370 = vunpack.c.h.b16 %v625
    %v1371 = vunpack.c.l.b16 %v626
    %v1372 = vunpack.c.h.b16 %v626
    %v1373 = vunpack.c.l.b16 %v627
    %v1374 = vunpack.c.h.b16 %v627
    %v1375 = vunpack.c.l.b16 %v628
    %v1376 = vunpack.c.h.b16 %v628
    %v1377 = vunpack.c.l.b16 %v629
    %v1378 = vunpack.c.h.b16 %v629
    %v1379 = vunpack.c.l.b16 %v630
    %v1380 = vunpack.c.h.b16 %v630
    %v1381 = vunpack.c.l.b16 %v631
    %v1382 = vunpack.c.h.b16 %v631
    %v1383 = vunpack.c.l.b16 %v632
    %v1384 = vunpack.c.h.b16 %v632
    %v1385 = vunpack.c.l.b16 %v633
    %v1386 = vunpack.c.h.b16 %v633
    %v1387 = vunpack.c.l.b16 %v634
    %v1388 = vunpack.c.h.b16 %v634
    %v1389 = vunpack.c.l.b16 %v635
    %v1390 = vunpack.c.h.b16 %v635
    %v1391 = vunpack.c.l.b16 %v636
    %v1392 = vunpack.c.h.b16 %v636
    %v1393 = vunpack.c.l.b16 %v637
    %v1394 = vunpack.c.h.b16 %v637
    %v1395 = vunpack.c.l.b16 %v638
    %v1396 = vunpack.c.h.b16 %v638
    %v1397 = vunpack.c.l.b16 %v639
    %v1398 = vunpack.c.h.b16 %v639
    %v1399 = vunpack.c.l.b16 %v640
    %v1400 = vunpack.c.h.b16 %v640
    %v1401 = vunpack.c.l.b16 %v641
    %v1402 = vunpack.c.h.b16 %v641
    %v1403 = vunpack.c.l.b16 %v642
    %v1404 = vunpack.c.h.b16 %v642
    %v1405 = vunpack.c.l.b16 %v643
    %v1406 = vunpack.c.h.b16 %v643
    %v1407 = vunpack.c.l.b16 %v644
    %v1408 = vunpack.c.h.b16 %v644
    %v1409 = vunpack.c.l.b16 %v645
    %v1410 = vunpack.c.h.b16 %v645
    %v1411 = vunpack.c.l.b16 %v646
    %v1412 = vunpack.c.h.b16 %v646
    %v1413 = vunpack.c.l.b16 %v647
    %v1414 = vunpack.c.h.b16 %v647
    %v1415 = vunpack.c.l.b16 %v648
    %v1416 = vunpack.c.h.b16 %v648
    %v1417 = vunpack.c.l.b16 %v649
    %v1418 = vunpack.c.h.b16 %v649
    %v1419 = vunpack.c.l.b16 %v650
    %v1420 = vunpack.c.h.b16 %v650
    %v1421 = vunpack.c.l.b16 %v651
    %v1422 = vunpack.c.h.b16 %v651
    %v1423 = vunpack.c.l.b16 %v652
    %v1424 = vunpack.c.h.b16 %v652
    %v1425 = vunpack.c.l.b16 %v653
    %v1426 = vunpack.c.h.b16 %v653
    %v1427 = vunpack.c.l.b16 %v654
    %v1428 = vunpack.c.h.b16 %v654
    %v1429 = vunpack.c.l.b16 %v655
    %v1430 = vunpack.c.h.b16 %v655
    %v1431 = vunpack.c.l.b16 %v656
    %v1432 = vunpack.c.h.b16 %v656
    %v1433 = vunpack.c.l.b16 %v657
    %v1434 = vunpack.c.h.b16 %v657
    %v1435 = vunpack.c.l.b16 %v658
    %v1436 = vunpack.c.h.b16 %v658
    %v1437 = vunpack.c.l.b16 %v659
    %v1438 = vunpack.c.h.b16 %v659
    %v1439 = vunpack.c.l.b16 %v660
    %v1440 = vunpack.c.h.b16 %v660
    %v1441 = vunpack.c.l.b16 %v661
    %v1442 = vunpack.c.h.b16 %v661
    %v1443 = vunpack.c.l.b16 %v662
    %v1444 = vunpack.c.h.b16 %v662
    %v1445 = vunpack.c.l.b16 %v663
    %v1446 = vunpack.c.h.b16 %v663
    %v1447 = vunpack.c.l.b16 %v664
    %v1448 = vunpack.c.h.b16 %v664
    %v1449 = vunpack.c.l.b16 %v665
    %v1450 = vunpack.c.h.b16 %v665
    %v1451 = vunpack.c.l.b16 %v666
    %v1452 = vunpack.c.h.b16 %v666
    %v1453 = vunpack.c.l.b16 %v667
    %v1454 = vunpack.c.h.b16 %v667
    %v1455 = vunpack.c.l.b16 %v668
    %v1456 = vunpack.c.h.b16 %v668
    %v1457 = vunpack.c.l.b16 %v669
    %v1458 = vunpack.c.h.b16 %v669
    %v1459 = vunpack.c.l.b16 %v670
    %v1460 = vunpack.c.h.b16 %v670
    %v1461 = vunpack.c.l.b16 %v671
    %v1462 = vunpack.c.h.b16 %v671
    %v1463 = vunpack.c.l.b16 %v672
    %v1464 = vunpack.c.h.b16 %v672
    %v1465 = vunpack.c.l.b16 %v673
    %v1466 = vunpack.c.h.b16 %v673
    %v1467 = vunpack.c.l.b16 %v674
    %v1468 = vunpack.c.h.b16 %v674
    %v1469 = vunpack.c.l.b16 %v675
    %v1470 = vunpack.c.h.b16 %v675
    %v1471 = vunpack.c.l.b16 %v676
    %v1472 = vunpack.c.h.b16 %v676
    %v1473 = vunpack.c.l.b16 %v677
    %v1474 = vunpack.c.h.b16 %v677
    %v1475 = vunpack.c.l.b16 %v678
    %v1476 = vunpack.c.h.b16 %v678
    %v1477 = vunpack.c.l.b16 %v679
    %v1478 = vunpack.c.h.b16 %v679
    %v1479 = vunpack.c.l.b16 %v680
    %v1480 = vunpack.c.h.b16 %v680
    %v1481 = vunpack.c.l.b16 %v681
    %v1482 = vunpack.c.h.b16 %v681
    %v1483 = vunpack.c.l.b16 %v682
    %v1484 = vunpack.c.h.b16 %v682
    %v1485 = vunpack.c.l.b16 %v683
    %v1486 = vunpack.c.h.b16 %v683
    %v1487 = vunpack.c.l.b16 %v684
    %v1488 = vunpack.c.h.b16 %v684
    %v1489 = vunpack.c.l.b16 %v685
    %v1490 = vunpack.c.h.b16 %v685
    %v1491 = vunpack.c.l.b16 %v686
    %v1492 = vunpack.c.h.b16 %v686
    %v1493 = vunpack.c.l.b16 %v687
    %v1494 = vunpack.c.h.b16 %v687
    %v1495 = vunpack.c.l.b16 %v688
    %v1496 = vunpack.c.h.b16 %v688
    %v1497 = vunpack.c.l.b16 %v689
    %v1498 = vunpack.c.h.b16 %v689
    %v1499 = vunpack.c.l.b16 %v690
    %v1500 = vunpack.c.h.b16 %v690
    %v1501 = vunpack.c.l.b16 %v691
    %v1502 = vunpack.c.h.b16 %v691
    %v1503 = vunpack.c.l.b16 %v692
    %v1504 = vunpack.c.h.b16 %v692
    %v1505 = vunpack.c.l.b16 %v693
    %v1506 = vunpack.c.h.b16 %v693
    %v1507 = vunpack.c.l.b16 %v694
    %v1508 = vunpack.c.h.b16 %v694
    %v1509 = vunpack.c.l.b16 %v695
    %v1510 = vunpack.c.h.b16 %v695
    %v1511 = vunpack.c.l.b16 %v696
    %v1512 = vunpack.c.h.b16 %v696
    %v1513 = vunpack.c.l.b16 %v697
    %v1514 = vunpack.c.h.b16 %v697
    %v1515 = vunpack.c.l.b16 %v698
    %v1516 = vunpack.c.h.b16 %v698
    %v1517 = vunpack.c.l.b16 %v699
    %v1518 = vunpack.c.h.b16 %v699
    %v1519 = vunpack.c.l.b16 %v700
    %v1520 = vunpack.c.h.b16 %v700
    %v1521 = vunpack.c.l.b16 %v701
    %v1522 = vunpack.c.h.b16 %v701
    %v1523 = vunpack.c.l.b16 %v702
    %v1524 = vunpack.c.h.b16 %v702
    %v1525 = vunpack.c.l.b16 %v703
    %v1526 = vunpack.c.h.b16 %v703
    %v1527 = vunpack.c.l.b16 %v704
    %v1528 = vunpack.c.h.b16 %v704
    %v1529 = vunpack.c.l.b16 %v705
    %v1530 = vunpack.c.h.b16 %v705
    %v1531 = vunpack.c.l.b16 %v706
    %v1532 = vunpack.c.h.b16 %v706
    %v1533 = vunpack.c.l.b16 %v707
    %v1534 = vunpack.c.h.b16 %v707
    %v1535 = vunpack.c.l.b16 %v708
    %v1536 = vunpack.c.h.b16 %v708
    %v1537 = vunpack.c.l.b16 %v709
    %v1538 = vunpack.c.h.b16 %v709
    %v1539 = vunpack.c.l.b16 %v710
    %v1540 = vunpack.c.h.b16 %v710
    %v1541 = vunpack.c.l.b16 %v711
    %v1542 = vunpack.c.h.b16 %v711
    %v1543 = vunpack.c.l.b16 %v712
    %v1544 = vunpack.c.h.b16 %v712
    %v1545 = vunpack.c.l.b16 %v713
    %v1546 = vunpack.c.h.b16 %v713
    %v1547 = vunpack.c.l.b16 %v714
    %v1548 = vunpack.c.h.b16 %v714
    %v1549 = vunpack.c.l.b16 %v715
    %v1550 = vunpack.c.h.b16 %v715
    %v1551 = vunpack.c.l.b16 %v716
    %v1552 = vunpack.c.h.b16 %v716
    %v1553 = vunpack.c.l.b16 %v717
    %v1554 = vunpack.c.h.b16 %v717
    %v1555 = vunpack.c.l.b16 %v718
    %v1556 = vunpack.c.h.b16 %v718
    %v1557 = vunpack.c.l.b16 %v719
    %v1558 = vunpack.c.h.b16 %v719
    %v1559 = vunpack.c.l.b16 %v720
    %v1560 = vunpack.c.h.b16 %v720
    %v1561 = vunpack.c.l.b16 %v721
    %v1562 = vunpack.c.h.b16 %v721
    %v1563 = vunpack.c.l.b16 %v722
    %v1564 = vunpack.c.h.b16 %v722
    %v1565 = vunpack.c.l.b16 %v723
    %v1566 = vunpack.c.h.b16 %v723
    %v1567 = vunpack.c.l.b16 %v724
    %v1568 = vunpack.c.h.b16 %v724
    %v1569 = vunpack.c.l.b16 %v725
    %v1570 = vunpack.c.h.b16 %v725
    %v1571 = vunpack.c.l.b16 %v726
    %v1572 = vunpack.c.h.b16 %v726
    %v1573 = vunpack.c.l.b16 %v727
    %v1574 = vunpack.c.h.b16 %v727
    %v1575 = vunpack.c.l.b16 %v728
    %v1576 = vunpack.c.h.b16 %v728
    %v1577 = vunpack.c.l.b16 %v729
    %v1578 = vunpack.c.h.b16 %v729
    %v1579 = vunpack.c.l.b16 %v730
    %v1580 = vunpack.c.h.b16 %v730
    %v1581 = vunpack.c.l.b16 %v731
    %v1582 = vunpack.c.h.b16 %v731
    %v1583 = vunpack.c.l.b16 %v732
    %v1584 = vunpack.c.h.b16 %v732
    %v1585 = vunpack.c.l.b16 %v733
    %v1586 = vunpack.c.h.b16 %v733
    %v1587 = vunpack.c.l.b16 %v734
    %v1588 = vunpack.c.h.b16 %v734
    %v1589 = vunpack.c.l.b16 %v735
    %v1590 = vunpack.c.h.b16 %v735
    %v1591 = vunpack.c.l.b16 %v736
    %v1592 = vunpack.c.h.b16 %v736
    %v1593 = vunpack.c.l.b16 %v737
    %v1594 = vunpack.c.h.b16 %v737
    %v1595 = vunpack.c.l.b16 %v738
    %v1596 = vunpack.c.h.b16 %v738
    %v1597 = vunpack.c.l.b16 %v739
    %v1598 = vunpack.c.h.b16 %v739
    %v1599 = vunpack.c.l.b16 %v740
    %v1600 = vunpack.c.h.b16 %v740
    %v1601 = vunpack.c.l.b16 %v741
    %v1602 = vunpack.c.h.b16 %v741
    %v1603 = vunpack.c.l.b16 %v742
    %v1604 = vunpack.c.h.b16 %v742
    %v1605 = vunpack.c.l.b16 %v743
    %v1606 = vunpack.c.h.b16 %v743
    %v1607 = vunpack.c.l.b16 %v744
    %v1608 = vunpack.c.h.b16 %v744
    %v1609 = vunpack.c.l.b16 %v745
    %v1610 = vunpack.c.h.b16 %v745
    %v1611 = vunpack.c.l.b16 %v746
    %v1612 = vunpack.c.h.b16 %v746
    %v1613 = vunpack.c.l.b16 %v747
    %v1614 = vunpack.c.h.b16 %v747
    %v1615 = vunpack.c.l.b16 %v748
    %v1616 = vunpack.c.h.b16 %v748
    %v1617 = vunpack.c.l.b16 %v749
    %v1618 = vunpack.c.h.b16 %v749
    %v1619 = vunpack.c.l.b16 %v750
    %v1620 = vunpack.c.h.b16 %v750
    %v1621 = vunpack.c.l.b16 %v751
    %v1622 = vunpack.c.h.b16 %v751
    %v1623 = vunpack.c.l.b16 %v752
    %v1624 = vunpack.c.h.b16 %v752
    %v1625 = vunpack.c.l.b16 %v753
    %v1626 = vunpack.c.h.b16 %v753
    %v1627 = vunpack.c.l.b16 %v754
    %v1628 = vunpack.c.h.b16 %v754
    %v1629 = vunpack.c.l.b16 %v755
    %v1630 = vunpack.c.h.b16 %v755
    %v1631 = vunpack.c.l.b16 %v756
    %v1632 = vunpack.c.h.b16 %v756
    %v1633 = vunpack.c.l.b16 %v757
    %v1634 = vunpack.c.h.b16 %v757
    %v1635 = vunpack.c.l.b16 %v758
    %v1636 = vunpack.c.h.b16 %v758
    %v1637 = vunpack.c.l.b16 %v759
    %v1638 = vunpack.c.h.b16 %v759
    %v1639 = vunpack.c.l.b16 %v760
    %v1640 = vunpack.c.h.b16 %v760
    %v1641 = vunpack.c.l.b16 %v761
    %v1642 = vunpack.c.h.b16 %v761
    %v1643 = vunpack.c.l.b16 %v762
    %v1644 = vunpack.c.h.b16 %v762
    %v1645 = vunpack.c.l.b16 %v763
    %v1646 = vunpack.c.h.b16 %v763
    %v1647 = vunpack.c.l.b16 %v764
    %v1648 = vunpack.c.h.b16 %v764
    %v1649 = vunpack.c.l.b16 %v765
    %v1650 = vunpack.c.h.b16 %v765
    %v1651 = vunpack.c.l.b16 %v766
    %v1652 = vunpack.c.h.b16 %v766
    %v1653 = vunpack.c.l.b16 %v767
    %v1654 = vunpack.c.h.b16 %v767
    %v1655 = vunpack.c.l.b16 %v768
    %v1656 = vunpack.c.h.b16 %v768
    %v1657 = vunpack.c.l.b16 %v769
    %v1658 = vunpack.c.h.b16 %v769
    %v1659 = vunpack.c.l.b16 %v770
    %v1660 = vunpack.c.h.b16 %v770
    %v1661 = vunpack.c.l.b16 %v771
    %v1662 = vunpack.c.h.b16 %v771
    %v1663 = vunpack.c.l.b16 %v772
    %v1664 = vunpack.c.h.b16 %v772
    %v1665 = vunpack.c.l.b16 %v773
    %v1666 = vunpack.c.h.b16 %v773
    %v1667 = vunpack.c.l.b16 %v774
    %v1668 = vunpack.c.h.b16 %v774
    %v1669 = vunpack.c.l.b16 %v775
    %v1670 = vunpack.c.h.b16 %v775
    %v1671 = vunpack.c.l.b16 %v776
    %v1672 = vunpack.c.h.b16 %v776
    %v1673 = vpack.c.b16 %v1103, %v1097
    %v1674 = vpack.c.b16 %v1104, %v1098
    %v1675 = vpack.c.b16 %v1105, %v1099
    %v1676 = vpack.c.b16 %v1106, %v1100
    %v1677 = vpack.c.b16 %v1107, %v1101
    %v1678 = vpack.c.b16 %v1108, %v1102
    %v1679 = vpack.c.b16 %v1115, %v1109
    %v1680 = vpack.c.b16 %v1116, %v1110
    %v1681 = vpack.c.b16 %v1117, %v1111
    %v1682 = vpack.c.b16 %v1118, %v1112
    %v1683 = vpack.c.b16 %v1119, %v1113
    %v1684 = vpack.c.b16 %v1120, %v1114
    %v1685 = vpack.c.b16 %v1127, %v1121
    %v1686 = vpack.c.b16 %v1128, %v1122
    %v1687 = vpack.c.b16 %v1129, %v1123
    %v1688 = vpack.c.b16 %v1130, %v1124
    %v1689 = vpack.c.b16 %v1131, %v1125
    %v1690 = vpack.c.b16 %v1132, %v1126
    %v1691 = vpack.c.b16 %v1139, %v1133
    %v1692 = vpack.c.b16 %v1140, %v1134
    %v1693 = vpack.c.b16 %v1141, %v1135
    %v1694 = vpack.c.b16 %v1142, %v1136
    %v1695 = vpack.c.b16 %v1143, %v1137
    %v1696 = vpack.c.b16 %v1144, %v1138
    %v1697 = vpack.c.b16 %v1151, %v1145
    %v1698 = vpack.c.b16 %v1152, %v1146
    %v1699 = vpack.c.b16 %v1153, %v1147
    %v1700 = vpack.c.b16 %v1154, %v1148
    %v1701 = vpack.c.b16 %v1155, %v1149
    %v1702 = vpack.c.b16 %v1156, %v1150
    %v1703 = vpack.c.b16 %v1163, %v1157
    %v1704 = vpack.c.b16 %v1164, %v1158
    %v1705 = vpack.c.b16 %v1165, %v1159
    %v1706 = vpack.c.b16 %v1166, %v1160
    %v1707 = vpack.c.b16 %v1167, %v1161
    %v1708 = vpack.c.b16 %v1168, %v1162
    %v1709 = vpack.c.b16 %v1175, %v1169
    %v1710 = vpack.c.b16 %v1176, %v1170
    %v1711 = vpack.c.b16 %v1177, %v1171
    %v1712 = vpack.c.b16 %v1178, %v1172
    %v1713 = vpack.c.b16 %v1179, %v1173
    %v1714 = vpack.c.b16 %v1180, %v1174
    %v1715 = vpack.c.b16 %v1187, %v1181
    %v1716 = vpack.c.b16 %v1188, %v1182
    %v1717 = vpack.c.b16 %v1189, %v1183
    %v1718 = vpack.c.b16 %v1190, %v1184
    %v1719 = vpack.c.b16 %v1191, %v1185
    %v1720 = vpack.c.b16 %v1192, %v1186
    %v1721 = vpack.c.b16 %v1199, %v1193
    %v1722 = vpack.c.b16 %v1200, %v1194
    %v1723 = vpack.c.b16 %v1201, %v1195
    %v1724 = vpack.c.b16 %v1202, %v1196
    %v1725 = vpack.c.b16 %v1203, %v1197
    %v1726 = vpack.c.b16 %v1204, %v1198
    %v1727 = vpack.c.b16 %v1211, %v1205
    %v1728 = vpack.c.b16 %v1212, %v1206
    %v1729 = vpack.c.b16 %v1213, %v1207
    %v1730 = vpack.c.b16 %v1214, %v1208
    %v1731 = vpack.c.b16 %v1215, %v1209
    %v1732 = vpack.c.b16 %v1216, %v1210
    %v1733 = vpack.c.b16 %v1223, %v1217
    %v1734 = vpack.c.b16 %v1224, %v1218
    %v1735 = vpack.c.b16 %v1225, %v1219
    %v1736 = vpack.c.b16 %v1226, %v1220
    %v1737 = vpack.c.b16 %v1227, %v1221
    %v1738 = vpack.c.b16 %v1228, %v1222
    %v1739 = vpack.c.b16 %v1235, %v1229
    %v1740 = vpack.c.b16 %v1236, %v1230
    %v1741 = vpack.c.b16 %v1237, %v1231
    %v1742 = vpack.c.b16 %v1238, %v1232
    %v1743 = vpack.c.b16 %v1239, %v1233
    %v1744 = vpack.c.b16 %v1240, %v1234
    %v1745 = vpack.c.b16 %v1247, %v1241
    %v1746 = vpack.c.b16 %v1248, %v1242
    %v1747 = vpack.c.b16 %v1249, %v1243
    %v1748 = vpack.c.b16 %v1250, %v1244
    %v1749 = vpack.c.b16 %v1251, %v1245
    %v1750 = vpack.c.b16 %v1252, %v1246
    %v1751 = vpack.c.b16 %v1259, %v1253
    %v1752 = vpack.c.b16 %v1260, %v1254
    %v1753 = vpack.c.b16 %v1261, %v1255
    %v1754 = vpack.c.b16 %v1262, %v1256
    %v1755 = vpack.c.b16 %v1263, %v1257
    %v1756 = vpack.c.b16 %v1264, %v1258
    %v1757 = vpack.c.b16 %v1271, %v1265
    %v1758 = vpack.c.b16 %v1272, %v1266
    %v1759 = vpack.c.b16 %v1273, %v1267
    %v1760 = vpack.c.b16 %v1274, %v1268
    %v1761 = vpack.c.b16 %v1275, %v1269
    %v1762 = vpack.c.b16 %v1276, %v1270
    %v1763 = vpack.c.b16 %v1283, %v1277
    %v1764 = vpack.c.b16 %v1284, %v1278
    %v1765 = vpack.c.b16 %v1285, %v1279
    %v1766 = vpack.c.b16 %v1286, %v1280
    %v1767 = vpack.c.b16 %v1287, %v1281
    %v1768 = vpack.c.b16 %v1288, %v1282
    %v1769 = vpack.c.b16 %v1295, %v1289
    %v1770 = vpack.c.b16 %v1296, %v1290
    %v1771 = vpack.c.b16 %v1297, %v1291
    %v1772 = vpack.c.b16 %v1298, %v1292
    %v1773 = vpack.c.b16 %v1299, %v1293
    %v1774 = vpack.c.b16 %v1300, %v1294
    %v1775 = vpack.c.b16 %v1307, %v1301
    %v1776 = vpack.c.b16 %v1308, %v1302
    %v1777 = vpack.c.b16 %v1309, %v1303
    %v1778 = vpack.c.b16 %v1310, %v1304
    %v1779 = vpack.c.b16 %v1311, %v1305
    %v1780 = vpack.c.b16 %v1312, %v1306
    %v1781 = vpack.c.b16 %v1319, %v1313
    %v1782 = vpack.c.b16 %v1320, %v1314
    %v1783 = vpack.c.b16 %v1321, %v1315
    %v1784 = vpack.c.b16 %v1322, %v1316
    %v1785 = vpack.c.b16 %v1323, %v1317
    %v1786 = vpack.c.b16 %v1324, %v1318
    %v1787 = vpack.c.b16 %v1331, %v1325
    %v1788 = vpack.c.b16 %v1332, %v1326
    %v1789 = vpack.c.b16 %v1333, %v1327
    %v1790 = vpack.c.b16 %v1334, %v1328
    %v1791 = vpack.c.b16 %v1335, %v1329
    %v1792 = vpack.c.b16 %v1336, %v1330
    %v1793 = vpack.c.b16 %v1343, %v1337
    %v1794 = vpack.c.b16 %v1344, %v1338
    %v1795 = vpack.c.b16 %v1345, %v1339
    %v1796 = vpack.c.b16 %v1346, %v1340
    %v1797 = vpack.c.b16 %v1347, %v1341
    %v1798 = vpack.c.b16 %v1348, %v1342
    %v1799 = vpack.c.b16 %v1355, %v1349
    %v1800 = vpack.c.b16 %v1356, %v1350
    %v1801 = vpack.c.b16 %v1357, %v1351
    %v1802 = vpack.c.b16 %v1358, %v1352
    %v1803 = vpack.c.b16 %v1359, %v1353
    %v1804 = vpack.c.b16 %v1360, %v1354
    %v1805 = vpack.c.b16 %v1367, %v1361
    %v1806 = vpack.c.b16 %v1368, %v1362
    %v1807 = vpack.c.b16 %v1369, %v1363
    %v1808 = vpack.c.b16 %v1370, %v1364
    %v1809 = vpack.c.b16 %v1371, %v1365
    %v1810 = vpack.c.b16 %v1372, %v1366
    %v1811 = vpack.c.b16 %v1379, %v1373
    %v1812 = vpack.c.b16 %v1380, %v1374
    %v1813 = vpack.c.b16 %v1381, %v1375
    %v1814 = vpack.c.b16 %v1382, %v1376
    %v1815 = vpack.c.b16 %v1383, %v1377
    %v1816 = vpack.c.b16 %v1384, %v1378
    %v1817 = vpack.c.b16 %v1391, %v1385
    %v1818 = vpack.c.b16 %v1392, %v1386
    %v1819 = vpack.c.b16 %v1393, %v1387
    %v1820 = vpack.c.b16 %v1394, %v1388
    %v1821 = vpack.c.b16 %v1395, %v1389
    %v1822 = vpack.c.b16 %v1396, %v1390
    %v1823 = vpack.c.b16 %v1403, %v1397
    %v1824 = vpack.c.b16 %v1404, %v1398
    %v1825 = vpack.c.b16 %v1405, %v1399
    %v1826 = vpack.c.b16 %v1406, %v1400
    %v1827 = vpack.c.b16 %v1407, %v1401
    %v1828 = vpack.c.b16 %v1408, %v1402
    %v1829 = vpack.c.b16 %v1415, %v1409
    %v1830 = vpack.c.b16 %v1416, %v1410
    %v1831 = vpack.c.b16 %v1417, %v1411
    %v1832 = vpack.c.b16 %v1418, %v1412
    %v1833 = vpack.c.b16 %v1419, %v1413
    %v1834 = vpack.c.b16 %v1420, %v1414
    %v1835 = vpack.c.b16 %v1427, %v1421
    %v1836 = vpack.c.b16 %v1428, %v1422
    %v1837 = vpack.c.b16 %v1429, %v1423
    %v1838 = vpack.c.b16 %v1430, %v1424
    %v1839 = vpack.c.b16 %v1431, %v1425
    %v1840 = vpack.c.b16 %v1432, %v1426
    %v1841 = vpack.c.b16 %v1439, %v1433
    %v1842 = vpack.c.b16 %v1440, %v1434
    %v1843 = vpack.c.b16 %v1441, %v1435
    %v1844 = vpack.c.b16 %v1442, %v1436
    %v1845 = vpack.c.b16 %v1443, %v1437
    %v1846 = vpack.c.b16 %v1444, %v1438
    %v1847 = vpack.c.b16 %v1451, %v1445
    %v1848 = vpack.c.b16 %v1452, %v1446
    %v1849 = vpack.c.b16 %v1453, %v1447
    %v1850 = vpack.c.b16 %v1454, %v1448
    %v1851 = vpack.c.b16 %v1455, %v1449
    %v1852 = vpack.c.b16 %v1456, %v1450
    %v1853 = vpack.c.b16 %v1463, %v1457
    %v1854 = vpack.c.b16 %v1464, %v1458
    %v1855 = vpack.c.b16 %v1465, %v1459
    %v1856 = vpack.c.b16 %v1466, %v1460
    %v1857 = vpack.c.b16 %v1467, %v1461
    %v1858 = vpack.c.b16 %v1468, %v1462
    %v1859 = vpack.c.b16 %v1475, %v1469
    %v1860 = vpack.c.b16 %v1476, %v1470
    %v1861 = vpack.c.b16 %v1477, %v1471
    %v1862 = vpack.c.b16 %v1478, %v1472
    %v1863 = vpack.c.b16 %v1479, %v1473
    %v1864 = vpack.c.b16 %v1480, %v1474
    %v1865 = vpack.c.b16 %v1487, %v1481
    %v1866 = vpack.c.b16 %v1488, %v1482
    %v1867 = vpack.c.b16 %v1489, %v1483
    %v1868 = vpack.c.b16 %v1490, %v1484
    %v1869 = vpack.c.b16 %v1491, %v1485
    %v1870 = vpack.c.b16 %v1492, %v1486
    %v1871 = vpack.c.b16 %v1499, %v1493
    %v1872 = vpack.c.b16 %v1500, %v1494
    %v1873 = vpack.c.b16 %v1501, %v1495
    %v1874 = vpack.c.b16 %v1502, %v1496
    %v1875 = vpack.c.b16 %v1503, %v1497
    %v1876 = vpack.c.b16 %v1504, %v1498
    %v1877 = vpack.c.b16 %v1511, %v1505
    %v1878 = vpack.c.b16 %v1512, %v1506
    %v1879 = vpack.c.b16 %v1513, %v1507
    %v1880 = vpack.c.b16 %v1514, %v1508
    %v1881 = vpack.c.b16 %v1515, %v1509
    %v1882 = vpack.c.b16 %v1516, %v1510
    %v1883 = vpack.c.b16 %v1523, %v1517
    %v1884 = vpack.c.b16 %v1524, %v1518
    %v1885 = vpack.c.b16 %v1525, %v1519
    %v1886 = vpack.c.b16 %v1526, %v1520
    %v1887 = vpack.c.b16 %v1527, %v1521
    %v1888 = vpack.c.b16 %v1528, %v1522
    %v1889 = vpack.c.b16 %v1535, %v1529
    %v1890 = vpack.c.b16 %v1536, %v1530
    %v1891 = vpack.c.b16 %v1537, %v1531
    %v1892 = vpack.c.b16 %v1538, %v1532
    %v1893 = vpack.c.b16 %v1539, %v1533
    %v1894 = vpack.c.b16 %v1540, %v1534
    %v1895 = vpack.c.b16 %v1547, %v1541
    %v1896 = vpack.c.b16 %v1548, %v1542
    %v1897 = vpack.c.b16 %v1549, %v1543
    %v1898 = vpack.c.b16 %v1550, %v1544
    %v1899 = vpack.c.b16 %v1551, %v1545
    %v1900 = vpack.c.b16 %v1552, %v1546
    %v1901 = vpack.c.b16 %v1559, %v1553
    %v1902 = vpack.c.b16 %v1560, %v1554
    %v1903 = vpack.c.b16 %v1561, %v1555
    %v1904 = vpack.c.b16 %v1562, %v1556
    %v1905 = vpack.c.b16 %v1563, %v1557
    %v1906 = vpack.c.b16 %v1564, %v1558
    %v1907 = vpack.c.b16 %v1571, %v1565
    %v1908 = vpack.c.b16 %v1572, %v1566
    %v1909 = vpack.c.b16 %v1573, %v1567
    %v1910 = vpack.c.b16 %v1574, %v1568
    %v1911 = vpack.c.b16 %v1575, %v1569
    %v1912 = vpack.c.b16 %v1576, %v1570
    %v1913 = vpack.c.b16 %v1583, %v1577
    %v1914 = vpack.c.b16 %v1584, %v1578
    %v1915 = vpack.c.b16 %v1585, %v1579
    %v1916 = vpack.c.b16 %v1586, %v1580
    %v1917 = vpack.c.b16 %v1587, %v1581
    %v1918 = vpack.c.b16 %v1588, %v1582
    %v1919 = vpack.c.b16 %v1595, %v1589
    %v1920 = vpack.c.b16 %v1596, %v1590
    %v1921 = vpack.c.b16 %v1597, %v1591
    %v1922 = vpack.c.b16 %v1598, %v1592
    %v1923 = vpack.c.b16 %v1599, %v1593
    %v1924 = vpack.c.b16 %v1600, %v1594
    %v1925 = vpack.c.b16 %v1607, %v1601
    %v1926 = vpack.c.b16 %v1608, %v1602
    %v1927 = vpack.c.b16 %v1609, %v1603
    %v1928 = vpack.c.b16 %v1610, %v1604
    %v1929 = vpack.c.b16 %v1611, %v1605
    %v1930 = vpack.c.b16 %v1612, %v1606
    %v1931 = vpack.c.b16 %v1619, %v1613
    %v1932 = vpack.c.b16 %v1620, %v1614
    %v1933 = vpack.c.b16 %v1621, %v1615
    %v1934 = vpack.c.b16 %v1622, %v1616
    %v1935 = vpack.c.b16 %v1623, %v1617
    %v1936 = vpack.c.b16 %v1624, %v1618
    %v1937 = vpack.c.b16 %v1631, %v1625
    %v1938 = vpack.c.b16 %v1632, %v1626
    %v1939 = vpack.c.b16 %v1633, %v1627
    %v1940 = vpack.c.b16 %v1634, %v1628
    %v1941 = vpack.c.b16 %v1635, %v1629
    %v1942 = vpack.c.b16 %v1636, %v1630
    %v1943 = vpack.c.b16 %v1643, %v1637
    %v1944 = vpack.c.b16 %v1644, %v1638
    %v1945 = vpack.c.b16 %v1645, %v1639
    %v1946 = vpack.c.b16 %v1646, %v1640
    %v1947 = vpack.c.b16 %v1647, %v1641
    %v1948 = vpack.c.b16 %v1648, %v1642
    %v1949 = vpack.c.b16 %v1655, %v1649
    %v1950 = vpack.c.b16 %v1656, %v1650
    %v1951 = vpack.c.b16 %v1657, %v1651
    %v1952 = vpack.c.b16 %v1658, %v1652
    %v1953 = vpack.c.b16 %v1659, %v1653
    %v1954 = vpack.c.b16 %v1660, %v1654
    %v1955 = vpack.c.b16 %v1667, %v1661
    %v1956 = vpack.c.b16 %v1668, %v1662
    %v1957 = vpack.c.b16 %v1669, %v1663
    %v1958 = vpack.c.b16 %v1670, %v1664
    %v1959 = vpack.c.b16 %v1671, %v1665
    %v1960 = vpack.c.b16 %v1672, %v1666
    %2249 = vmatprep.subr.bf16.mxu0 %v1716
    %2250 = vmatpush1.bf16.msra.mxu0 %v1715
    %2251 = vmatprep.subr.bf16.mxu0 %v1710
    %2252 = vmatpush1.bf16.msra.mxu0 %v1709
    %2253 = vmatprep.subr.bf16.mxu0 %v1704
    %2254 = vmatpush1.bf16.msra.mxu0 %v1703
    %2255 = vmatprep.subr.bf16.mxu0 %v1698
    %2256 = vmatpush1.bf16.msra.mxu0 %v1697
    %2257 = vmatprep.subr.bf16.mxu0 %v1692
    %2258 = vmatpush1.bf16.msra.mxu0 %v1691
    %2259 = vmatprep.subr.bf16.mxu0 %v1686
    %2260 = vmatpush1.bf16.msra.mxu0 %v1685
    %2261 = vmatprep.subr.bf16.mxu0 %v1680
    %2262 = vmatpush1.bf16.msra.mxu0 %v1679
    %2263 = vmatprep.subr.bf16.mxu0 %v1674
    %2264 = vmatpush1.bf16.msra.mxu0 %v1673
    %2265 = vmatprep.subr.bf16.mxu0 %v1764
    %2266 = vmatpush2.bf16.msra.mxu0 %v1763
    %2267 = vmatprep.subr.bf16.mxu0 %v1758
    %2268 = vmatpush2.bf16.msra.mxu0 %v1757
    %2269 = vmatprep.subr.bf16.mxu0 %v1752
    %2270 = vmatpush2.bf16.msra.mxu0 %v1751
    %2271 = vmatprep.subr.bf16.mxu0 %v1746
    %2272 = vmatpush2.bf16.msra.mxu0 %v1745
    %2273 = vmatprep.subr.bf16.mxu0 %v1740
    %2274 = vmatpush2.bf16.msra.mxu0 %v1739
    %2275 = vmatprep.subr.bf16.mxu0 %v1734
    %2276 = vmatpush2.bf16.msra.mxu0 %v1733
    %2277 = vmatprep.subr.bf16.mxu0 %v1728
    %2278 = vmatpush2.bf16.msra.mxu0 %v1727
    %2279 = vmatprep.subr.bf16.mxu0 %v1722
    %2280 = vmatpush2.bf16.msra.mxu0 %v1721
    %2281 = vmatprep.mubr.bf16.mxu0 %v484
    %2282 = vmatmul.mubr.bf16.gmra.mxu0 %v483
    %v2283 = vpop.f32.mrf.mxu0
    %v2284 = vadd.f32 %v782, %v2283
    %v2285 = vpop.f32.mrf.mxu0
    %v2286 = vadd.f32 %v786, %v2285
    %v2287 = vpop.f32.mrf.mxu0
    %v2288 = vpop.f32.mrf.mxu0
    %2289 = vdwg.mxu0
    %2290 = vmatprep.subr.bf16.mxu0 %v1812
    %2291 = vmatpush1.bf16.msra.mxu0 %v1811
    %2292 = vmatprep.subr.bf16.mxu0 %v1806
    %2293 = vmatpush1.bf16.msra.mxu0 %v1805
    %2294 = vmatprep.subr.bf16.mxu0 %v1800
    %2295 = vmatpush1.bf16.msra.mxu0 %v1799
    %2296 = vmatprep.subr.bf16.mxu0 %v1794
    %2297 = vmatpush1.bf16.msra.mxu0 %v1793
    %2298 = vmatprep.subr.bf16.mxu0 %v1788
    %2299 = vmatpush1.bf16.msra.mxu0 %v1787
    %2300 = vmatprep.subr.bf16.mxu0 %v1782
    %2301 = vmatpush1.bf16.msra.mxu0 %v1781
    %2302 = vmatprep.subr.bf16.mxu0 %v1776
    %2303 = vmatpush1.bf16.msra.mxu0 %v1775
    %2304 = vmatprep.subr.bf16.mxu0 %v1770
    %2305 = vmatpush1.bf16.msra.mxu0 %v1769
    %2306 = vmatprep.subr.bf16.mxu0 %v1860
    %2307 = vmatpush2.bf16.msra.mxu0 %v1859
    %2308 = vmatprep.subr.bf16.mxu0 %v1854
    %2309 = vmatpush2.bf16.msra.mxu0 %v1853
    %2310 = vmatprep.subr.bf16.mxu0 %v1848
    %2311 = vmatpush2.bf16.msra.mxu0 %v1847
    %2312 = vmatprep.subr.bf16.mxu0 %v1842
    %2313 = vmatpush2.bf16.msra.mxu0 %v1841
    %2314 = vmatprep.subr.bf16.mxu0 %v1836
    %2315 = vmatpush2.bf16.msra.mxu0 %v1835
    %2316 = vmatprep.subr.bf16.mxu0 %v1830
    %2317 = vmatpush2.bf16.msra.mxu0 %v1829
    %2318 = vmatprep.subr.bf16.mxu0 %v1824
    %2319 = vmatpush2.bf16.msra.mxu0 %v1823
    %2320 = vmatprep.subr.bf16.mxu0 %v1818
    %2321 = vmatpush2.bf16.msra.mxu0 %v1817
    %2322 = vmatprep.mubr.bf16.mxu0 %v486
    %2323 = vmatmul.mubr.bf16.gmra.mxu0 %v485
    %v2324 = vpop.f32.mrf.mxu0
    %v2325 = vadd.f32 %v2284, %v2324
    %v2326 = vpop.f32.mrf.mxu0
    %v2327 = vadd.f32 %v2286, %v2326
    %v2328 = vpop.f32.mrf.mxu0
    %v2329 = vpop.f32.mrf.mxu0
    %2330 = vdwg.mxu0
    %2331 = vmatprep.subr.bf16.mxu0 %v1908
    %2332 = vmatpush1.bf16.msra.mxu0 %v1907
    %2333 = vmatprep.subr.bf16.mxu0 %v1902
    %2334 = vmatpush1.bf16.msra.mxu0 %v1901
    %2335 = vmatprep.subr.bf16.mxu0 %v1896
    %2336 = vmatpush1.bf16.msra.mxu0 %v1895
    %2337 = vmatprep.subr.bf16.mxu0 %v1890
    %2338 = vmatpush1.bf16.msra.mxu0 %v1889
    %2339 = vmatprep.subr.bf16.mxu0 %v1884
    %2340 = vmatpush1.bf16.msra.mxu0 %v1883
    %2341 = vmatprep.subr.bf16.mxu0 %v1878
    %2342 = vmatpush1.bf16.msra.mxu0 %v1877
    %2343 = vmatprep.subr.bf16.mxu0 %v1872
    %2344 = vmatpush1.bf16.msra.mxu0 %v1871
    %2345 = vmatprep.subr.bf16.mxu0 %v1866
    %2346 = vmatpush1.bf16.msra.mxu0 %v1865
    %2347 = vmatprep.subr.bf16.mxu0 %v1956
    %2348 = vmatpush2.bf16.msra.mxu0 %v1955
    %2349 = vmatprep.subr.bf16.mxu0 %v1950
    %2350 = vmatpush2.bf16.msra.mxu0 %v1949
    %2351 = vmatprep.subr.bf16.mxu0 %v1944
    %2352 = vmatpush2.bf16.msra.mxu0 %v1943
    %2353 = vmatprep.subr.bf16.mxu0 %v1938
    %2354 = vmatpush2.bf16.msra.mxu0 %v1937
    %2355 = vmatprep.subr.bf16.mxu0 %v1932
    %2356 = vmatpush2.bf16.msra.mxu0 %v1931
    %2357 = vmatprep.subr.bf16.mxu0 %v1926
    %2358 = vmatpush2.bf16.msra.mxu0 %v1925
    %2359 = vmatprep.subr.bf16.mxu0 %v1920
    %2360 = vmatpush2.bf16.msra.mxu0 %v1919
    %2361 = vmatprep.subr.bf16.mxu0 %v1914
    %2362 = vmatpush2.bf16.msra.mxu0 %v1913
    %2363 = vmatprep.mubr.bf16.mxu0 %v488
    %2364 = vmatmul.mubr.bf16.gmra.mxu0 %v487
    %v2365 = vpop.f32.mrf.mxu0
    %v2366 = vadd.f32 %v2325, %v2365
    %v2367 = vpop.f32.mrf.mxu0
    %v2368 = vadd.f32 %v2327, %v2367
    %v2369 = vpop.f32.mrf.mxu0
    %v2370 = vpop.f32.mrf.mxu0
    %2371 = vdwg.mxu0
    %2372 = vmatprep.subr.bf16.mxu0 %v1718
    %2373 = vmatpush1.bf16.msra.mxu0 %v1717
    %2374 = vmatprep.subr.bf16.mxu0 %v1712
    %2375 = vmatpush1.bf16.msra.mxu0 %v1711
    %2376 = vmatprep.subr.bf16.mxu0 %v1706
    %2377 = vmatpush1.bf16.msra.mxu0 %v1705
    %2378 = vmatprep.subr.bf16.mxu0 %v1700
    %2379 = vmatpush1.bf16.msra.mxu0 %v1699
    %2380 = vmatprep.subr.bf16.mxu0 %v1694
    %2381 = vmatpush1.bf16.msra.mxu0 %v1693
    %2382 = vmatprep.subr.bf16.mxu0 %v1688
    %2383 = vmatpush1.bf16.msra.mxu0 %v1687
    %2384 = vmatprep.subr.bf16.mxu0 %v1682
    %2385 = vmatpush1.bf16.msra.mxu0 %v1681
    %2386 = vmatprep.subr.bf16.mxu0 %v1676
    %2387 = vmatpush1.bf16.msra.mxu0 %v1675
    %2388 = vmatprep.subr.bf16.mxu0 %v1766
    %2389 = vmatpush2.bf16.msra.mxu0 %v1765
    %2390 = vmatprep.subr.bf16.mxu0 %v1760
    %2391 = vmatpush2.bf16.msra.mxu0 %v1759
    %2392 = vmatprep.subr.bf16.mxu0 %v1754
    %2393 = vmatpush2.bf16.msra.mxu0 %v1753
    %2394 = vmatprep.subr.bf16.mxu0 %v1748
    %2395 = vmatpush2.bf16.msra.mxu0 %v1747
    %2396 = vmatprep.subr.bf16.mxu0 %v1742
    %2397 = vmatpush2.bf16.msra.mxu0 %v1741
    %2398 = vmatprep.subr.bf16.mxu0 %v1736
    %2399 = vmatpush2.bf16.msra.mxu0 %v1735
    %2400 = vmatprep.subr.bf16.mxu0 %v1730
    %2401 = vmatpush2.bf16.msra.mxu0 %v1729
    %2402 = vmatprep.subr.bf16.mxu0 %v1724
    %2403 = vmatpush2.bf16.msra.mxu0 %v1723
    %2404 = vmatprep.mubr.bf16.mxu0 %v484
    %2405 = vmatmul.mubr.bf16.gmra.mxu0 %v483
    %v2406 = vpop.f32.mrf.mxu0
    %v2407 = vadd.f32 %v790, %v2406
    %v2408 = vpop.f32.mrf.mxu0
    %v2409 = vadd.f32 %v794, %v2408
    %v2410 = vpop.f32.mrf.mxu0
    %v2411 = vpop.f32.mrf.mxu0
    %2412 = vdwg.mxu0
    %2413 = vmatprep.subr.bf16.mxu0 %v1814
    %2414 = vmatpush1.bf16.msra.mxu0 %v1813
    %2415 = vmatprep.subr.bf16.mxu0 %v1808
    %2416 = vmatpush1.bf16.msra.mxu0 %v1807
    %2417 = vmatprep.subr.bf16.mxu0 %v1802
    %2418 = vmatpush1.bf16.msra.mxu0 %v1801
    %2419 = vmatprep.subr.bf16.mxu0 %v1796
    %2420 = vmatpush1.bf16.msra.mxu0 %v1795
    %2421 = vmatprep.subr.bf16.mxu0 %v1790
    %2422 = vmatpush1.bf16.msra.mxu0 %v1789
    %2423 = vmatprep.subr.bf16.mxu0 %v1784
    %2424 = vmatpush1.bf16.msra.mxu0 %v1783
    %2425 = vmatprep.subr.bf16.mxu0 %v1778
    %2426 = vmatpush1.bf16.msra.mxu0 %v1777
    %2427 = vmatprep.subr.bf16.mxu0 %v1772
    %2428 = vmatpush1.bf16.msra.mxu0 %v1771
    %2429 = vmatprep.subr.bf16.mxu0 %v1862
    %2430 = vmatpush2.bf16.msra.mxu0 %v1861
    %2431 = vmatprep.subr.bf16.mxu0 %v1856
    %2432 = vmatpush2.bf16.msra.mxu0 %v1855
    %2433 = vmatprep.subr.bf16.mxu0 %v1850
    %2434 = vmatpush2.bf16.msra.mxu0 %v1849
    %2435 = vmatprep.subr.bf16.mxu0 %v1844
    %2436 = vmatpush2.bf16.msra.mxu0 %v1843
    %2437 = vmatprep.subr.bf16.mxu0 %v1838
    %2438 = vmatpush2.bf16.msra.mxu0 %v1837
    %2439 = vmatprep.subr.bf16.mxu0 %v1832
    %2440 = vmatpush2.bf16.msra.mxu0 %v1831
    %2441 = vmatprep.subr.bf16.mxu0 %v1826
    %2442 = vmatpush2.bf16.msra.mxu0 %v1825
    %2443 = vmatprep.subr.bf16.mxu0 %v1820
    %2444 = vmatpush2.bf16.msra.mxu0 %v1819
    %2445 = vmatprep.mubr.bf16.mxu0 %v486
    %2446 = vmatmul.mubr.bf16.gmra.mxu0 %v485
    %v2447 = vpop.f32.mrf.mxu0
    %v2448 = vadd.f32 %v2407, %v2447
    %v2449 = vpop.f32.mrf.mxu0
    %v2450 = vadd.f32 %v2409, %v2449
    %v2451 = vpop.f32.mrf.mxu0
    %v2452 = vpop.f32.mrf.mxu0
    %2453 = vdwg.mxu0
    %2454 = vmatprep.subr.bf16.mxu0 %v1910
    %2455 = vmatpush1.bf16.msra.mxu0 %v1909
    %2456 = vmatprep.subr.bf16.mxu0 %v1904
    %2457 = vmatpush1.bf16.msra.mxu0 %v1903
    %2458 = vmatprep.subr.bf16.mxu0 %v1898
    %2459 = vmatpush1.bf16.msra.mxu0 %v1897
    %2460 = vmatprep.subr.bf16.mxu0 %v1892
    %2461 = vmatpush1.bf16.msra.mxu0 %v1891
    %2462 = vmatprep.subr.bf16.mxu0 %v1886
    %2463 = vmatpush1.bf16.msra.mxu0 %v1885
    %2464 = vmatprep.subr.bf16.mxu0 %v1880
    %2465 = vmatpush1.bf16.msra.mxu0 %v1879
    %2466 = vmatprep.subr.bf16.mxu0 %v1874
    %2467 = vmatpush1.bf16.msra.mxu0 %v1873
    %2468 = vmatprep.subr.bf16.mxu0 %v1868
    %2469 = vmatpush1.bf16.msra.mxu0 %v1867
    %2470 = vmatprep.subr.bf16.mxu0 %v1958
    %2471 = vmatpush2.bf16.msra.mxu0 %v1957
    %2472 = vmatprep.subr.bf16.mxu0 %v1952
    %2473 = vmatpush2.bf16.msra.mxu0 %v1951
    %2474 = vmatprep.subr.bf16.mxu0 %v1946
    %2475 = vmatpush2.bf16.msra.mxu0 %v1945
    %2476 = vmatprep.subr.bf16.mxu0 %v1940
    %2477 = vmatpush2.bf16.msra.mxu0 %v1939
    %2478 = vmatprep.subr.bf16.mxu0 %v1934
    %2479 = vmatpush2.bf16.msra.mxu0 %v1933
    %2480 = vmatprep.subr.bf16.mxu0 %v1928
    %2481 = vmatpush2.bf16.msra.mxu0 %v1927
    %2482 = vmatprep.subr.bf16.mxu0 %v1922
    %2483 = vmatpush2.bf16.msra.mxu0 %v1921
    %2484 = vmatprep.subr.bf16.mxu0 %v1916
    %2485 = vmatpush2.bf16.msra.mxu0 %v1915
    %2486 = vmatprep.mubr.bf16.mxu0 %v488
    %2487 = vmatmul.mubr.bf16.gmra.mxu0 %v487
    %v2488 = vpop.f32.mrf.mxu0
    %v2489 = vadd.f32 %v2448, %v2488
    %v2490 = vpop.f32.mrf.mxu0
    %v2491 = vadd.f32 %v2450, %v2490
    %v2492 = vpop.f32.mrf.mxu0
    %v2493 = vpop.f32.mrf.mxu0
    %2494 = vdwg.mxu0
    %2495 = vmatprep.subr.bf16.mxu0 %v1720
    %2496 = vmatpush1.bf16.msra.mxu0 %v1719
    %2497 = vmatprep.subr.bf16.mxu0 %v1714
    %2498 = vmatpush1.bf16.msra.mxu0 %v1713
    %2499 = vmatprep.subr.bf16.mxu0 %v1708
    %2500 = vmatpush1.bf16.msra.mxu0 %v1707
    %2501 = vmatprep.subr.bf16.mxu0 %v1702
    %2502 = vmatpush1.bf16.msra.mxu0 %v1701
    %2503 = vmatprep.subr.bf16.mxu0 %v1696
    %2504 = vmatpush1.bf16.msra.mxu0 %v1695
    %2505 = vmatprep.subr.bf16.mxu0 %v1690
    %2506 = vmatpush1.bf16.msra.mxu0 %v1689
    %2507 = vmatprep.subr.bf16.mxu0 %v1684
    %2508 = vmatpush1.bf16.msra.mxu0 %v1683
    %2509 = vmatprep.subr.bf16.mxu0 %v1678
    %2510 = vmatpush1.bf16.msra.mxu0 %v1677
    %2511 = vmatprep.subr.bf16.mxu0 %v1768
    %2512 = vmatpush2.bf16.msra.mxu0 %v1767
    %2513 = vmatprep.subr.bf16.mxu0 %v1762
    %2514 = vmatpush2.bf16.msra.mxu0 %v1761
    %2515 = vmatprep.subr.bf16.mxu0 %v1756
    %2516 = vmatpush2.bf16.msra.mxu0 %v1755
    %2517 = vmatprep.subr.bf16.mxu0 %v1750
    %2518 = vmatpush2.bf16.msra.mxu0 %v1749
    %2519 = vmatprep.subr.bf16.mxu0 %v1744
    %2520 = vmatpush2.bf16.msra.mxu0 %v1743
    %2521 = vmatprep.subr.bf16.mxu0 %v1738
    %2522 = vmatpush2.bf16.msra.mxu0 %v1737
    %2523 = vmatprep.subr.bf16.mxu0 %v1732
    %2524 = vmatpush2.bf16.msra.mxu0 %v1731
    %2525 = vmatprep.subr.bf16.mxu0 %v1726
    %2526 = vmatpush2.bf16.msra.mxu0 %v1725
    %2527 = vmatprep.mubr.bf16.mxu0 %v484
    %2528 = vmatmul.mubr.bf16.gmra.mxu0 %v483
    %v2529 = vpop.f32.mrf.mxu0
    %v2530 = vadd.f32 %v798, %v2529
    %v2531 = vpop.f32.mrf.mxu0
    %v2532 = vadd.f32 %v802, %v2531
    %v2533 = vpop.f32.mrf.mxu0
    %v2534 = vpop.f32.mrf.mxu0
    %2535 = vdwg.mxu0
    %2536 = vmatprep.subr.bf16.mxu0 %v1816
    %2537 = vmatpush1.bf16.msra.mxu0 %v1815
    %2538 = vmatprep.subr.bf16.mxu0 %v1810
    %2539 = vmatpush1.bf16.msra.mxu0 %v1809
    %2540 = vmatprep.subr.bf16.mxu0 %v1804
    %2541 = vmatpush1.bf16.msra.mxu0 %v1803
    %2542 = vmatprep.subr.bf16.mxu0 %v1798
    %2543 = vmatpush1.bf16.msra.mxu0 %v1797
    %2544 = vmatprep.subr.bf16.mxu0 %v1792
    %2545 = vmatpush1.bf16.msra.mxu0 %v1791
    %2546 = vmatprep.subr.bf16.mxu0 %v1786
    %2547 = vmatpush1.bf16.msra.mxu0 %v1785
    %2548 = vmatprep.subr.bf16.mxu0 %v1780
    %2549 = vmatpush1.bf16.msra.mxu0 %v1779
    %2550 = vmatprep.subr.bf16.mxu0 %v1774
    %2551 = vmatpush1.bf16.msra.mxu0 %v1773
    %2552 = vmatprep.subr.bf16.mxu0 %v1864
    %2553 = vmatpush2.bf16.msra.mxu0 %v1863
    %2554 = vmatprep.subr.bf16.mxu0 %v1858
    %2555 = vmatpush2.bf16.msra.mxu0 %v1857
    %2556 = vmatprep.subr.bf16.mxu0 %v1852
    %2557 = vmatpush2.bf16.msra.mxu0 %v1851
    %2558 = vmatprep.subr.bf16.mxu0 %v1846
    %2559 = vmatpush2.bf16.msra.mxu0 %v1845
    %2560 = vmatprep.subr.bf16.mxu0 %v1840
    %2561 = vmatpush2.bf16.msra.mxu0 %v1839
    %2562 = vmatprep.subr.bf16.mxu0 %v1834
    %2563 = vmatpush2.bf16.msra.mxu0 %v1833
    %2564 = vmatprep.subr.bf16.mxu0 %v1828
    %2565 = vmatpush2.bf16.msra.mxu0 %v1827
    %2566 = vmatprep.subr.bf16.mxu0 %v1822
    %2567 = vmatpush2.bf16.msra.mxu0 %v1821
    %2568 = vmatprep.mubr.bf16.mxu0 %v486
    %2569 = vmatmul.mubr.bf16.gmra.mxu0 %v485
    %v2570 = vpop.f32.mrf.mxu0
    %v2571 = vadd.f32 %v2530, %v2570
    %v2572 = vpop.f32.mrf.mxu0
    %v2573 = vadd.f32 %v2532, %v2572
    %v2574 = vpop.f32.mrf.mxu0
    %v2575 = vpop.f32.mrf.mxu0
    %2576 = vdwg.mxu0
    %2577 = vmatprep.subr.bf16.mxu0 %v1912
    %2578 = vmatpush1.bf16.msra.mxu0 %v1911
    %2579 = vmatprep.subr.bf16.mxu0 %v1906
    %2580 = vmatpush1.bf16.msra.mxu0 %v1905
    %2581 = vmatprep.subr.bf16.mxu0 %v1900
    %2582 = vmatpush1.bf16.msra.mxu0 %v1899
    %2583 = vmatprep.subr.bf16.mxu0 %v1894
    %2584 = vmatpush1.bf16.msra.mxu0 %v1893
    %2585 = vmatprep.subr.bf16.mxu0 %v1888
    %2586 = vmatpush1.bf16.msra.mxu0 %v1887
    %2587 = vmatprep.subr.bf16.mxu0 %v1882
    %2588 = vmatpush1.bf16.msra.mxu0 %v1881
    %2589 = vmatprep.subr.bf16.mxu0 %v1876
    %2590 = vmatpush1.bf16.msra.mxu0 %v1875
    %2591 = vmatprep.subr.bf16.mxu0 %v1870
    %2592 = vmatpush1.bf16.msra.mxu0 %v1869
    %2593 = vmatprep.subr.bf16.mxu0 %v1960
    %2594 = vmatpush2.bf16.msra.mxu0 %v1959
    %2595 = vmatprep.subr.bf16.mxu0 %v1954
    %2596 = vmatpush2.bf16.msra.mxu0 %v1953
    %2597 = vmatprep.subr.bf16.mxu0 %v1948
    %2598 = vmatpush2.bf16.msra.mxu0 %v1947
    %2599 = vmatprep.subr.bf16.mxu0 %v1942
    %2600 = vmatpush2.bf16.msra.mxu0 %v1941
    %2601 = vmatprep.subr.bf16.mxu0 %v1936
    %2602 = vmatpush2.bf16.msra.mxu0 %v1935
    %2603 = vmatprep.subr.bf16.mxu0 %v1930
    %2604 = vmatpush2.bf16.msra.mxu0 %v1929
    %2605 = vmatprep.subr.bf16.mxu0 %v1924
    %2606 = vmatpush2.bf16.msra.mxu0 %v1923
    %2607 = vmatprep.subr.bf16.mxu0 %v1918
    %2608 = vmatpush2.bf16.msra.mxu0 %v1917
    %2609 = vmatprep.mubr.bf16.mxu0 %v488
    %2610 = vmatmul.mubr.bf16.gmra.mxu0 %v487
    %v2611 = vpop.f32.mrf.mxu0
    %v2612 = vadd.f32 %v2571, %v2611
    %v2613 = vpop.f32.mrf.mxu0
    %v2614 = vadd.f32 %v2573, %v2613
    %v2615 = vpop.f32.mrf.mxu0
    %v2616 = vpop.f32.mrf.mxu0
    %2617 = vdwg.mxu0
    %v2618 = vtanh.pop %v2366
    %v2619 = vtanh.pop %v2368
    %v2620 = vtanh.pop %v2489
    %v2621 = vtanh.pop %v2491
    %v2622 = vtanh.pop %v2612
    %v2623 = vtanh.pop %v2614
    %v2624 = vpack.c.bf16 %v2618, %v2618
    %v2625 = vpack.c.bf16 %v2619, %v2619
    %v2626 = vpack.c.bf16 %v2620, %v2620
    %v2627 = vpack.c.bf16 %v2621, %v2621
    %v2628 = vpack.c.bf16 %v2622, %v2622
    %v2629 = vpack.c.bf16 %v2623, %v2623
    %v2630 = vld [vmem:[#allocation13] sm:$0xf]
    %v2631 = vld [vmem:[#allocation13 + $0x4] sm:$0xf]
    %v2632 = vld [vmem:[#allocation13 + $0x8] sm:$0xf]
    %v2633 = vld [vmem:[#allocation13 + $0xc] sm:$0xf]
    %v2634 = vld [vmem:[#allocation13 + $0x10] sm:$0xf]
    %v2635 = vld [vmem:[#allocation13 + $0x14] sm:$0xf]
    %v2636 = vld [vmem:[#allocation13 + $0x18] sm:$0xf]
    %v2637 = vld [vmem:[#allocation13 + $0x1c] sm:$0xf]
    %v2638 = vld [vmem:[#allocation13 + $0x20] sm:$0xf]
    %v2639 = vld [vmem:[#allocation13 + $0x24] sm:$0xf]
    %v2640 = vld [vmem:[#allocation13 + $0x28] sm:$0xf]
    %v2641 = vld [vmem:[#allocation13 + $0x2c] sm:$0xf]
    %v2642 = vld [vmem:[#allocation13 + $0x30] sm:$0xf]
    %v2643 = vld [vmem:[#allocation13 + $0x34] sm:$0xf]
    %v2644 = vld [vmem:[#allocation13 + $0x38] sm:$0xf]
    %v2645 = vld [vmem:[#allocation13 + $0x3c] sm:$0xf]
    %v2646 = vld [vmem:[#allocation13 + $0x40] sm:$0xf]
    %v2647 = vld [vmem:[#allocation13 + $0x44] sm:$0xf]
    %v2648 = vld [vmem:[#allocation13 + $0x48] sm:$0xf]
    %v2649 = vld [vmem:[#allocation13 + $0x4c] sm:$0xf]
    %v2650 = vld [vmem:[#allocation13 + $0x50] sm:$0xf]
    %v2651 = vld [vmem:[#allocation13 + $0x54] sm:$0xf]
    %v2652 = vld [vmem:[#allocation13 + $0x58] sm:$0xf]
    %v2653 = vld [vmem:[#allocation13 + $0x5c] sm:$0xf]
    %v2654 = vld [vmem:[#allocation13 + $0x60] sm:$0xf]
    %v2655 = vld [vmem:[#allocation13 + $0x64] sm:$0xf]
    %v2656 = vld [vmem:[#allocation13 + $0x68] sm:$0xf]
    %v2657 = vld [vmem:[#allocation13 + $0x6c] sm:$0xf]
    %v2658 = vld [vmem:[#allocation13 + $0x70] sm:$0xf]
    %v2659 = vld [vmem:[#allocation13 + $0x74] sm:$0xf]
    %v2660 = vld [vmem:[#allocation13 + $0x78] sm:$0xf]
    %v2661 = vld [vmem:[#allocation13 + $0x7c] sm:$0xf]
    %v2662 = vld [vmem:[#allocation13 + $0x80] sm:$0xf]
    %v2663 = vld [vmem:[#allocation13 + $0x84] sm:$0xf]
    %v2664 = vld [vmem:[#allocation13 + $0x88] sm:$0xf]
    %v2665 = vld [vmem:[#allocation13 + $0x8c] sm:$0xf]
    %v2666 = vld [vmem:[#allocation13 + $0x90] sm:$0xf]
    %v2667 = vld [vmem:[#allocation13 + $0x94] sm:$0xf]
    %v2668 = vld [vmem:[#allocation13 + $0x98] sm:$0xf]
    %v2669 = vld [vmem:[#allocation13 + $0x9c] sm:$0xf]
    %v2670 = vld [vmem:[#allocation13 + $0xa0] sm:$0xf]
    %v2671 = vld [vmem:[#allocation13 + $0xa4] sm:$0xf]
    %v2672 = vld [vmem:[#allocation13 + $0xa8] sm:$0xf]
    %v2673 = vld [vmem:[#allocation13 + $0xac] sm:$0xf]
    %v2674 = vld [vmem:[#allocation13 + $0xb0] sm:$0xf]
    %v2675 = vld [vmem:[#allocation13 + $0xb4] sm:$0xf]
    %v2676 = vld [vmem:[#allocation13 + $0xb8] sm:$0xf]
    %v2677 = vld [vmem:[#allocation13 + $0xbc] sm:$0xf]
    %v2678 = vld [vmem:[#allocation13 + $0xc0] sm:$0xf]
    %v2679 = vld [vmem:[#allocation13 + $0xc4] sm:$0xf]
    %v2680 = vld [vmem:[#allocation13 + $0xc8] sm:$0xf]
    %v2681 = vld [vmem:[#allocation13 + $0xcc] sm:$0xf]
    %v2682 = vld [vmem:[#allocation13 + $0xd0] sm:$0xf]
    %v2683 = vld [vmem:[#allocation13 + $0xd4] sm:$0xf]
    %v2684 = vld [vmem:[#allocation13 + $0xd8] sm:$0xf]
    %v2685 = vld [vmem:[#allocation13 + $0xdc] sm:$0xf]
    %v2686 = vld [vmem:[#allocation13 + $0xe0] sm:$0xf]
    %v2687 = vld [vmem:[#allocation13 + $0xe4] sm:$0xf]
    %v2688 = vld [vmem:[#allocation13 + $0xe8] sm:$0xf]
    %v2689 = vld [vmem:[#allocation13 + $0xec] sm:$0xf]
    %v2690 = vld [vmem:[#allocation13 + $0xf0] sm:$0xf]
    %v2691 = vld [vmem:[#allocation13 + $0xf4] sm:$0xf]
    %v2692 = vld [vmem:[#allocation13 + $0xf8] sm:$0xf]
    %v2693 = vld [vmem:[#allocation13 + $0xfc] sm:$0xf]
    %v2694 = vld [vmem:[#allocation13 + $0x100] sm:$0xf]
    %v2695 = vld [vmem:[#allocation13 + $0x104] sm:$0xf]
    %v2696 = vld [vmem:[#allocation13 + $0x108] sm:$0xf]
    %v2697 = vld [vmem:[#allocation13 + $0x10c] sm:$0xf]
    %v2698 = vld [vmem:[#allocation13 + $0x110] sm:$0xf]
    %v2699 = vld [vmem:[#allocation13 + $0x114] sm:$0xf]
    %v2700 = vld [vmem:[#allocation13 + $0x118] sm:$0xf]
    %v2701 = vld [vmem:[#allocation13 + $0x11c] sm:$0xf]
    %v2702 = vld [vmem:[#allocation13 + $0x120] sm:$0xf]
    %v2703 = vld [vmem:[#allocation13 + $0x124] sm:$0xf]
    %v2704 = vld [vmem:[#allocation13 + $0x128] sm:$0xf]
    %v2705 = vld [vmem:[#allocation13 + $0x12c] sm:$0xf]
    %v2706 = vld [vmem:[#allocation13 + $0x130] sm:$0xf]
    %v2707 = vld [vmem:[#allocation13 + $0x134] sm:$0xf]
    %v2708 = vld [vmem:[#allocation13 + $0x138] sm:$0xf]
    %v2709 = vld [vmem:[#allocation13 + $0x13c] sm:$0xf]
    %v2710 = vld [vmem:[#allocation13 + $0x140] sm:$0xf]
    %v2711 = vld [vmem:[#allocation13 + $0x144] sm:$0xf]
    %v2712 = vld [vmem:[#allocation13 + $0x148] sm:$0xf]
    %v2713 = vld [vmem:[#allocation13 + $0x14c] sm:$0xf]
    %v2714 = vld [vmem:[#allocation13 + $0x150] sm:$0xf]
    %v2715 = vld [vmem:[#allocation13 + $0x154] sm:$0xf]
    %v2716 = vld [vmem:[#allocation13 + $0x158] sm:$0xf]
    %v2717 = vld [vmem:[#allocation13 + $0x15c] sm:$0xf]
    %v2718 = vld [vmem:[#allocation13 + $0x160] sm:$0xf]
    %v2719 = vld [vmem:[#allocation13 + $0x164] sm:$0xf]
    %v2720 = vld [vmem:[#allocation13 + $0x168] sm:$0xf]
    %v2721 = vld [vmem:[#allocation13 + $0x16c] sm:$0xf]
    %v2722 = vld [vmem:[#allocation13 + $0x170] sm:$0xf]
    %v2723 = vld [vmem:[#allocation13 + $0x174] sm:$0xf]
    %v2724 = vld [vmem:[#allocation13 + $0x178] sm:$0xf]
    %v2725 = vld [vmem:[#allocation13 + $0x17c] sm:$0xf]
    %v2726 = vld [vmem:[#allocation15] sm:$0x1]
    %v2728 = vlaneseq
    %v2729 = vshrl.u32 %v2728, 7
    %v2730 = vsub.s32 0, %v2729
    %v2731 = vrot.slane %v2726, %v2730
    %v2829 = vunpack.c.l.b16 %v2630
    %v2830 = vunpack.c.l.b16 %v2631
    %v2831 = vunpack.c.l.b16 %v2632
    %v2832 = vunpack.c.l.b16 %v2633
    %v2833 = vunpack.c.l.b16 %v2634
    %v2834 = vunpack.c.l.b16 %v2635
    %v2835 = vunpack.c.l.b16 %v2636
    %v2836 = vunpack.c.l.b16 %v2637
    %v2837 = vunpack.c.l.b16 %v2638
    %v2838 = vunpack.c.l.b16 %v2639
    %v2839 = vunpack.c.l.b16 %v2640
    %v2840 = vunpack.c.l.b16 %v2641
    %v2841 = vunpack.c.l.b16 %v2642
    %v2842 = vunpack.c.l.b16 %v2643
    %v2843 = vunpack.c.l.b16 %v2644
    %v2844 = vunpack.c.l.b16 %v2645
    %v2845 = vunpack.c.l.b16 %v2646
    %v2846 = vunpack.c.l.b16 %v2647
    %v2847 = vunpack.c.l.b16 %v2648
    %v2848 = vunpack.c.l.b16 %v2649
    %v2849 = vunpack.c.l.b16 %v2650
    %v2850 = vunpack.c.l.b16 %v2651
    %v2851 = vunpack.c.l.b16 %v2652
    %v2852 = vunpack.c.l.b16 %v2653
    %v2853 = vunpack.c.l.b16 %v2654
    %v2854 = vunpack.c.l.b16 %v2655
    %v2855 = vunpack.c.l.b16 %v2656
    %v2856 = vunpack.c.l.b16 %v2657
    %v2857 = vunpack.c.l.b16 %v2658
    %v2858 = vunpack.c.l.b16 %v2659
    %v2859 = vunpack.c.l.b16 %v2660
    %v2860 = vunpack.c.l.b16 %v2661
    %v2861 = vunpack.c.l.b16 %v2662
    %v2862 = vunpack.c.l.b16 %v2663
    %v2863 = vunpack.c.l.b16 %v2664
    %v2864 = vunpack.c.l.b16 %v2665
    %v2865 = vunpack.c.l.b16 %v2666
    %v2866 = vunpack.c.l.b16 %v2667
    %v2867 = vunpack.c.l.b16 %v2668
    %v2868 = vunpack.c.l.b16 %v2669
    %v2869 = vunpack.c.l.b16 %v2670
    %v2870 = vunpack.c.l.b16 %v2671
    %v2871 = vunpack.c.l.b16 %v2672
    %v2872 = vunpack.c.l.b16 %v2673
    %v2873 = vunpack.c.l.b16 %v2674
    %v2874 = vunpack.c.l.b16 %v2675
    %v2875 = vunpack.c.l.b16 %v2676
    %v2876 = vunpack.c.l.b16 %v2677
    %v2877 = vunpack.c.l.b16 %v2678
    %v2878 = vunpack.c.l.b16 %v2679
    %v2879 = vunpack.c.l.b16 %v2680
    %v2880 = vunpack.c.l.b16 %v2681
    %v2881 = vunpack.c.l.b16 %v2682
    %v2882 = vunpack.c.l.b16 %v2683
    %v2883 = vunpack.c.l.b16 %v2684
    %v2884 = vunpack.c.l.b16 %v2685
    %v2885 = vunpack.c.l.b16 %v2686
    %v2886 = vunpack.c.l.b16 %v2687
    %v2887 = vunpack.c.l.b16 %v2688
    %v2888 = vunpack.c.l.b16 %v2689
    %v2889 = vunpack.c.l.b16 %v2690
    %v2890 = vunpack.c.l.b16 %v2691
    %v2891 = vunpack.c.l.b16 %v2692
    %v2892 = vunpack.c.l.b16 %v2693
    %v2893 = vunpack.c.l.b16 %v2694
    %v2894 = vunpack.c.l.b16 %v2695
    %v2895 = vunpack.c.l.b16 %v2696
    %v2896 = vunpack.c.l.b16 %v2697
    %v2897 = vunpack.c.l.b16 %v2698
    %v2898 = vunpack.c.l.b16 %v2699
    %v2899 = vunpack.c.l.b16 %v2700
    %v2900 = vunpack.c.l.b16 %v2701
    %v2901 = vunpack.c.l.b16 %v2702
    %v2902 = vunpack.c.l.b16 %v2703
    %v2903 = vunpack.c.l.b16 %v2704
    %v2904 = vunpack.c.l.b16 %v2705
    %v2905 = vunpack.c.l.b16 %v2706
    %v2906 = vunpack.c.l.b16 %v2707
    %v2907 = vunpack.c.l.b16 %v2708
    %v2908 = vunpack.c.l.b16 %v2709
    %v2909 = vunpack.c.l.b16 %v2710
    %v2910 = vunpack.c.l.b16 %v2711
    %v2911 = vunpack.c.l.b16 %v2712
    %v2912 = vunpack.c.l.b16 %v2713
    %v2913 = vunpack.c.l.b16 %v2714
    %v2914 = vunpack.c.l.b16 %v2715
    %v2915 = vunpack.c.l.b16 %v2716
    %v2916 = vunpack.c.l.b16 %v2717
    %v2917 = vunpack.c.l.b16 %v2718
    %v2918 = vunpack.c.l.b16 %v2719
    %v2919 = vunpack.c.l.b16 %v2720
    %v2920 = vunpack.c.l.b16 %v2721
    %v2921 = vunpack.c.l.b16 %v2722
    %v2922 = vunpack.c.l.b16 %v2723
    %v2923 = vunpack.c.l.b16 %v2724
    %v2924 = vunpack.c.l.b16 %v2725
    %v2925 = vpack.c.b16 %v2830, %v2829
    %v2926 = vpack.c.b16 %v2832, %v2831
    %v2927 = vpack.c.b16 %v2834, %v2833
    %v2928 = vpack.c.b16 %v2836, %v2835
    %v2929 = vpack.c.b16 %v2838, %v2837
    %v2930 = vpack.c.b16 %v2840, %v2839
    %v2931 = vpack.c.b16 %v2842, %v2841
    %v2932 = vpack.c.b16 %v2844, %v2843
    %v2933 = vpack.c.b16 %v2846, %v2845
    %v2934 = vpack.c.b16 %v2848, %v2847
    %v2935 = vpack.c.b16 %v2850, %v2849
    %v2936 = vpack.c.b16 %v2852, %v2851
    %v2937 = vpack.c.b16 %v2854, %v2853
    %v2938 = vpack.c.b16 %v2856, %v2855
    %v2939 = vpack.c.b16 %v2858, %v2857
    %v2940 = vpack.c.b16 %v2860, %v2859
    %v2941 = vpack.c.b16 %v2862, %v2861
    %v2942 = vpack.c.b16 %v2864, %v2863
    %v2943 = vpack.c.b16 %v2866, %v2865
    %v2944 = vpack.c.b16 %v2868, %v2867
    %v2945 = vpack.c.b16 %v2870, %v2869
    %v2946 = vpack.c.b16 %v2872, %v2871
    %v2947 = vpack.c.b16 %v2874, %v2873
    %v2948 = vpack.c.b16 %v2876, %v2875
    %v2949 = vpack.c.b16 %v2878, %v2877
    %v2950 = vpack.c.b16 %v2880, %v2879
    %v2951 = vpack.c.b16 %v2882, %v2881
    %v2952 = vpack.c.b16 %v2884, %v2883
    %v2953 = vpack.c.b16 %v2886, %v2885
    %v2954 = vpack.c.b16 %v2888, %v2887
    %v2955 = vpack.c.b16 %v2890, %v2889
    %v2956 = vpack.c.b16 %v2892, %v2891
    %v2957 = vpack.c.b16 %v2894, %v2893
    %v2958 = vpack.c.b16 %v2896, %v2895
    %v2959 = vpack.c.b16 %v2898, %v2897
    %v2960 = vpack.c.b16 %v2900, %v2899
    %v2961 = vpack.c.b16 %v2902, %v2901
    %v2962 = vpack.c.b16 %v2904, %v2903
    %v2963 = vpack.c.b16 %v2906, %v2905
    %v2964 = vpack.c.b16 %v2908, %v2907
    %v2965 = vpack.c.b16 %v2910, %v2909
    %v2966 = vpack.c.b16 %v2912, %v2911
    %v2967 = vpack.c.b16 %v2914, %v2913
    %v2968 = vpack.c.b16 %v2916, %v2915
    %v2969 = vpack.c.b16 %v2918, %v2917
    %v2970 = vpack.c.b16 %v2920, %v2919
    %v2971 = vpack.c.b16 %v2922, %v2921
    %v2972 = vpack.c.b16 %v2924, %v2923
    %3021 = vmatprep.subr.bf16.mxu0 0
    %3022 = vmatpush1.bf16.msra.mxu0 %v2932
    %3023 = vmatprep.subr.bf16.mxu0 0
    %3024 = vmatpush1.bf16.msra.mxu0 %v2931
    %3025 = vmatprep.subr.bf16.mxu0 0
    %3026 = vmatpush1.bf16.msra.mxu0 %v2930
    %3027 = vmatprep.subr.bf16.mxu0 0
    %3028 = vmatpush1.bf16.msra.mxu0 %v2929
    %3029 = vmatprep.subr.bf16.mxu0 0
    %3030 = vmatpush1.bf16.msra.mxu0 %v2928
    %3031 = vmatprep.subr.bf16.mxu0 0
    %3032 = vmatpush1.bf16.msra.mxu0 %v2927
    %3033 = vmatprep.subr.bf16.mxu0 0
    %3034 = vmatpush1.bf16.msra.mxu0 %v2926
    %3035 = vmatprep.subr.bf16.mxu0 0
    %3036 = vmatpush1.bf16.msra.mxu0 %v2925
    %3037 = vmatprep.subr.bf16.mxu0 0
    %3038 = vmatpush2.bf16.msra.mxu0 %v2940
    %3039 = vmatprep.subr.bf16.mxu0 0
    %3040 = vmatpush2.bf16.msra.mxu0 %v2939
    %3041 = vmatprep.subr.bf16.mxu0 0
    %3042 = vmatpush2.bf16.msra.mxu0 %v2938
    %3043 = vmatprep.subr.bf16.mxu0 0
    %3044 = vmatpush2.bf16.msra.mxu0 %v2937
    %3045 = vmatprep.subr.bf16.mxu0 0
    %3046 = vmatpush2.bf16.msra.mxu0 %v2936
    %3047 = vmatprep.subr.bf16.mxu0 0
    %3048 = vmatpush2.bf16.msra.mxu0 %v2935
    %3049 = vmatprep.subr.bf16.mxu0 0
    %3050 = vmatpush2.bf16.msra.mxu0 %v2934
    %3051 = vmatprep.subr.bf16.mxu0 0
    %3052 = vmatpush2.bf16.msra.mxu0 %v2933
    %3053 = vmatprep.mubr.bf16.mxu0 %v2625
    %3054 = vmatmul.mubr.bf16.gmra.mxu0 %v2624
    %v3055 = vpop.f32.mrf.mxu0
    %v3056 = vadd.f32 %v2731, %v3055
    %v3057 = vpop.f32.mrf.mxu0
    %v3058 = vpop.f32.mrf.mxu0
    %v3059 = vpop.f32.mrf.mxu0
    %3060 = vdwg.mxu0
    %3061 = vmatprep.subr.bf16.mxu0 0
    %3062 = vmatpush1.bf16.msra.mxu0 %v2948
    %3063 = vmatprep.subr.bf16.mxu0 0
    %3064 = vmatpush1.bf16.msra.mxu0 %v2947
    %3065 = vmatprep.subr.bf16.mxu0 0
    %3066 = vmatpush1.bf16.msra.mxu0 %v2946
    %3067 = vmatprep.subr.bf16.mxu0 0
    %3068 = vmatpush1.bf16.msra.mxu0 %v2945
    %3069 = vmatprep.subr.bf16.mxu0 0
    %3070 = vmatpush1.bf16.msra.mxu0 %v2944
    %3071 = vmatprep.subr.bf16.mxu0 0
    %3072 = vmatpush1.bf16.msra.mxu0 %v2943
    %3073 = vmatprep.subr.bf16.mxu0 0
    %3074 = vmatpush1.bf16.msra.mxu0 %v2942
    %3075 = vmatprep.subr.bf16.mxu0 0
    %3076 = vmatpush1.bf16.msra.mxu0 %v2941
    %3077 = vmatprep.subr.bf16.mxu0 0
    %3078 = vmatpush2.bf16.msra.mxu0 %v2956
    %3079 = vmatprep.subr.bf16.mxu0 0
    %3080 = vmatpush2.bf16.msra.mxu0 %v2955
    %3081 = vmatprep.subr.bf16.mxu0 0
    %3082 = vmatpush2.bf16.msra.mxu0 %v2954
    %3083 = vmatprep.subr.bf16.mxu0 0
    %3084 = vmatpush2.bf16.msra.mxu0 %v2953
    %3085 = vmatprep.subr.bf16.mxu0 0
    %3086 = vmatpush2.bf16.msra.mxu0 %v2952
    %3087 = vmatprep.subr.bf16.mxu0 0
    %3088 = vmatpush2.bf16.msra.mxu0 %v2951
    %3089 = vmatprep.subr.bf16.mxu0 0
    %3090 = vmatpush2.bf16.msra.mxu0 %v2950
    %3091 = vmatprep.subr.bf16.mxu0 0
    %3092 = vmatpush2.bf16.msra.mxu0 %v2949
    %3093 = vmatprep.mubr.bf16.mxu0 %v2627
    %3094 = vmatmul.mubr.bf16.gmra.mxu0 %v2626
    %v3095 = vpop.f32.mrf.mxu0
    %v3096 = vadd.f32 %v3056, %v3095
    %v3097 = vpop.f32.mrf.mxu0
    %v3098 = vpop.f32.mrf.mxu0
    %v3099 = vpop.f32.mrf.mxu0
    %3100 = vdwg.mxu0
    %3101 = vmatprep.subr.bf16.mxu0 0
    %3102 = vmatpush1.bf16.msra.mxu0 %v2964
    %3103 = vmatprep.subr.bf16.mxu0 0
    %3104 = vmatpush1.bf16.msra.mxu0 %v2963
    %3105 = vmatprep.subr.bf16.mxu0 0
    %3106 = vmatpush1.bf16.msra.mxu0 %v2962
    %3107 = vmatprep.subr.bf16.mxu0 0
    %3108 = vmatpush1.bf16.msra.mxu0 %v2961
    %3109 = vmatprep.subr.bf16.mxu0 0
    %3110 = vmatpush1.bf16.msra.mxu0 %v2960
    %3111 = vmatprep.subr.bf16.mxu0 0
    %3112 = vmatpush1.bf16.msra.mxu0 %v2959
    %3113 = vmatprep.subr.bf16.mxu0 0
    %3114 = vmatpush1.bf16.msra.mxu0 %v2958
    %3115 = vmatprep.subr.bf16.mxu0 0
    %3116 = vmatpush1.bf16.msra.mxu0 %v2957
    %3117 = vmatprep.subr.bf16.mxu0 0
    %3118 = vmatpush2.bf16.msra.mxu0 %v2972
    %3119 = vmatprep.subr.bf16.mxu0 0
    %3120 = vmatpush2.bf16.msra.mxu0 %v2971
    %3121 = vmatprep.subr.bf16.mxu0 0
    %3122 = vmatpush2.bf16.msra.mxu0 %v2970
    %3123 = vmatprep.subr.bf16.mxu0 0
    %3124 = vmatpush2.bf16.msra.mxu0 %v2969
    %3125 = vmatprep.subr.bf16.mxu0 0
    %3126 = vmatpush2.bf16.msra.mxu0 %v2968
    %3127 = vmatprep.subr.bf16.mxu0 0
    %3128 = vmatpush2.bf16.msra.mxu0 %v2967
    %3129 = vmatprep.subr.bf16.mxu0 0
    %3130 = vmatpush2.bf16.msra.mxu0 %v2966
    %3131 = vmatprep.subr.bf16.mxu0 0
    %3132 = vmatpush2.bf16.msra.mxu0 %v2965
    %3133 = vmatprep.mubr.bf16.mxu0 %v2629
    %3134 = vmatmul.mubr.bf16.gmra.mxu0 %v2628
    %v3135 = vpop.f32.mrf.mxu0
    %v3136 = vadd.f32 %v3096, %v3135
    %v3137 = vpop.f32.mrf.mxu0
    %v3138 = vpop.f32.mrf.mxu0
    %v3139 = vpop.f32.mrf.mxu0
    %3140 = vdwg.mxu0
    %v3141 = vlaneseq
    %v3142 = vand.u32 %v3141, 127
    %vm3143 = vcmp.lt.s32.totalorder %v3142, 3
    %v3144 = vsel %vm3143, %v3136, -1e+30
    %3145 = vmax.xlane.f32.xlu0 %v3144
    %v3146 = vpop.xlane.xlu0 %3145
    %v3147 = vsub.f32 %v3144, %v3146
    %v3148 = vmul.f32 %v3147, 1.442695
    %v3149 = vpow.pop %v3148
    %3150 = vadd.xlane.f32.xlu0 %v3149
    %v3151 = vpop.xlane.xlu0 %3150
    %v3152 = vlog2.pop %v3151
    %v3153 = vmul.f32 %v3152, 0.6931472
    %v3154 = vsub.f32 %v3147, %v3153
    %3155 = vst [vmem:[#allocation16] sm:$0xff] %v3154
    // Predicated region
    $region74: #{tpu_custom_call.1} parent=1 // pred_check
      _
    $region75: #{tpu_custom_call.1} parent=1 // pred_check_branch
      %3157 = sbr.rel (0) target = $region77
    $region76: #{tpu_custom_call.1} parent=1 // pred_region
      %s3159 = ssub.s32 128, 128
      %3160 = vsyncadd [#allocation9], %s3159
      %s3162 = sshll.u32 [#allocation16], 4
      %s3163 = int_to_ptr.vmem [resolvable:$true] %s3162
      %3165 = dma.vmem_to_hbm [thread:$0]  %s3163, 128, %s7, [#allocation9]
    $region77: #{tpu_custom_call.1} parent=1 // pred_fallthru
      _
    // Predicated region
    $region78: #{tpu_custom_call.1} parent=1 // pred_check
      _
    $region79: #{tpu_custom_call.1} parent=1 // pred_check_branch
      %3167 = sbr.rel (0) target = $region81
    $region80: #{tpu_custom_call.1} parent=1 // pred_region
      %3168 = dma.done [#allocation9], 128
    $region81: #{tpu_custom_call.1} parent=1 // pred_fallthru
      _
    %3169 = vsyncpa [#allocation8], 1
    %3170 = vsyncpa [#allocation11], 1
    %3171 = vsyncpa [#allocation14], 1
    %3172 = vsyncpa [#allocation9], 1
  %3173 = vsyncmov [#allocation4]
  %s3174 = vpop.sfrf %3173
  %p3175 = scmp.eq.s32.totalorder %s3174, 0
  %p3176 = pneg %p3175
  %3178 = shalt.err (%p3176)
  %s3179 = scalar_lea.sflag [#allocation4], 1
  %3180 = vsyncmov %s3179
  %s3181 = vpop.sfrf %3180
  %p3182 = scmp.eq.s32.totalorder %s3181, 0
  %p3183 = pneg %p3182
  %3185 = shalt.err (%p3183)

</llo_original>
